<compile_context>
chip_gen: v5e
topology: v5e:2x2
jax: 0.10.0
libtpu: 0.0.40
codegen_flags: <defaults>
</compile_context>

<pallas_src>
import functools

import jax
import jax.numpy as jnp
import numpy as np
from jax import lax
from jax.experimental import pallas as pl
from jax.experimental.pallas import tpu as pltpu

NUM_CLASSES = 2


# --------------------------------------------------------------------------
# Pallas kernel: decode + confidence threshold + (fused) top-k-restricted
# greedy NMS for one image per grid step.
# --------------------------------------------------------------------------
def _detection_kernel(loc_ref, prior_ref, score_ref, out_ref, *,
                      conf_threshold, nms_threshold, var0, var1, topk):
    NEG = jnp.float32(-1e30)
    NEG_HALF = jnp.float32(-5e29)

    loc = loc_ref[0]          # (4, P) f32  [dx, dy, log_dw, log_dh]
    pri = prior_ref[...]      # (4, P) f32  [cx, cy, w, h]
    P = loc.shape[-1]

    p_cx, p_cy, p_w, p_h = pri[0:1], pri[1:2], pri[2:3], pri[3:4]
    l_dx, l_dy, l_dw, l_dh = loc[0:1], loc[1:2], loc[2:3], loc[3:4]

    # ---- SSD decode (matches canonical ssd.pytorch decode) ----
    cx = p_cx + l_dx * var0 * p_w
    cy = p_cy + l_dy * var0 * p_h
    bw = p_w * jnp.exp(l_dw * var1)
    bh = p_h * jnp.exp(l_dh * var1)
    x1 = cx - bw * 0.5
    y1 = cy - bh * 0.5
    x2 = bw + x1
    y2 = bh + y1
    area = (x2 - x1) * (y2 - y1)

    scores = score_ref[0]                         # (1, P) class-1 scores
    valid = scores > conf_threshold
    masked = jnp.where(valid, scores, NEG)

    lane = lax.broadcasted_iota(jnp.int32, (1, P), 1).astype(jnp.float32)
    p_sentinel = jnp.float32(P)

    # Loop-invariant stack for one-shot extraction of the picked box.
    coords = jnp.concatenate([x1, y1, x2, y2, area], axis=0)     # (5, P)

    TK = out_ref.shape[-1]
    out_lane = lax.broadcasted_iota(jnp.int32, (1, TK), 1).astype(jnp.float32)
    zero_row = jnp.zeros((1, TK), jnp.float32)

    # ---- single fused pass -------------------------------------------------
    # Iterate the valid priors in descending-score order for exactly `topk`
    # iterations (== torch nms's `idx = idx[-top_k:]` restriction).  A
    # candidate already suppressed by an earlier kept box is skipped;
    # otherwise it is kept and everything with IoU > nms_threshold is marked
    # suppressed.  All state is (1, P) lane vectors -> no ragged gathers.
    def body(_, carry):
        rem, sup, ks, kx1, ky1, kx2, ky2, cnt = carry

        m = jnp.max(rem)
        has = m > NEG_HALF
        pick = jnp.min(jnp.where(rem == m, lane, p_sentinel))
        one = (lane == pick) & has                 # (1, P) one-hot of the pick
        rem = jnp.where(one, NEG, rem)             # consumed from the stream

        # skip candidates already suppressed by an earlier kept box
        p_sup = jnp.sum(jnp.where(one, sup, 0.0))
        keep = has & (p_sup < 0.5)

        # extract [x1, y1, x2, y2, area] of the pick with one lane-reduction
        pv = jnp.sum(jnp.where(one, coords, 0.0), axis=1, keepdims=True)  # (5,1)
        px1, py1, px2, py2, pa = pv[0:1], pv[1:2], pv[2:3], pv[3:4], pv[4:5]

        # write the kept detection into output slot `cnt`
        slot = (out_lane == cnt) & keep
        ks = jnp.where(slot, m, ks)
        kx1 = jnp.where(slot, px1, kx1)
        ky1 = jnp.where(slot, py1, ky1)
        kx2 = jnp.where(slot, px2, kx2)
        ky2 = jnp.where(slot, py2, ky2)
        cnt = cnt + keep.astype(jnp.float32)

        # suppress everything with IoU > nms_threshold vs the kept box
        # (NaN IoU -> suppressed, matching torch's IoU.le() semantics)
        ix1 = jnp.maximum(x1, px1)
        iy1 = jnp.maximum(y1, py1)
        ix2 = jnp.minimum(x2, px2)
        iy2 = jnp.minimum(y2, py2)
        inter = jnp.maximum(ix2 - ix1, 0.0) * jnp.maximum(iy2 - iy1, 0.0)
        union = (area - inter) + pa
        iou = inter / union
        sup = jnp.where(keep & (~(iou <= nms_threshold)), jnp.float32(1.0), sup)
        return rem, sup, ks, kx1, ky1, kx2, ky2, cnt

    init = (masked, jnp.zeros((1, P), jnp.float32),
            zero_row, zero_row, zero_row, zero_row, zero_row, jnp.float32(0.0))
    _, _, ks, kx1, ky1, kx2, ky2, _ = lax.fori_loop(
        0, topk, body, init, unroll=(topk <= 32))

    # single unmasked lane-dense store of the whole (8, TK) slab
    out_ref[0] = jnp.concatenate(
        [ks, kx1, ky1, kx2, ky2, jnp.zeros((3, TK), jnp.float32)], axis=0)


# --------------------------------------------------------------------------
# Wrapper: layout, padding, pallas_call, and (B, 2, topk, 5) assembly.
# --------------------------------------------------------------------------
def make_detection_output(conf_threshold, nms_threshold, variances, topk):
    conf_threshold = float(conf_threshold)
    nms_threshold = float(nms_threshold)
    var0, var1 = float(variances[0]), float(variances[1])
    topk = int(topk)
    tk_pad = max(128, ((topk + 127) // 128) * 128)

    @jax.jit
    def detection_output(loc_data, conf_data, priors):
        B, P, _ = loc_data.shape
        P_pad = ((P + 127) // 128) * 128

        loc = loc_data.astype(jnp.float32)
        scores = conf_data[:, :, 1].astype(jnp.float32)
        pri = priors.astype(jnp.float32)
        if P_pad != P:
            pad = P_pad - P
            loc = jnp.pad(loc, ((0, 0), (0, pad), (0, 0)))
            scores = jnp.pad(scores, ((0, 0), (0, pad)), constant_values=-1e30)
            pri = jnp.pad(pri, ((0, pad), (0, 0)))

        loc_k = jnp.transpose(loc, (0, 2, 1))        # (B, 4, P_pad)
        pri_k = jnp.transpose(pri, (1, 0))           # (4, P_pad)
        score_k = scores[:, None, :]                 # (B, 1, P_pad)

        kernel = functools.partial(
            _detection_kernel,
            conf_threshold=conf_threshold, nms_threshold=nms_threshold,
            var0=var0, var1=var1, topk=topk)

        raw = pl.pallas_call(
            kernel,
            out_shape=jax.ShapeDtypeStruct((B, 8, tk_pad), jnp.float32),
            grid_spec=pltpu.PrefetchScalarGridSpec(
                num_scalar_prefetch=0,
                grid=(B,),
                in_specs=[
                    pl.BlockSpec((1, 4, P_pad), lambda b: (b, 0, 0)),
                    pl.BlockSpec((4, P_pad), lambda b: (0, 0)),
                    pl.BlockSpec((1, 1, P_pad), lambda b: (b, 0, 0)),
                ],
                out_specs=pl.BlockSpec((1, 8, tk_pad), lambda b: (b, 0, 0)),
            ),
            compiler_params=pltpu.CompilerParams(
                dimension_semantics=("parallel",)),
        )(loc_k, pri_k, score_k)

        # rows 0..4 = [score, x1, y1, x2, y2] -> (B, topk, 5), class 1 only
        kept = jnp.transpose(raw[:, 0:5, :topk], (0, 2, 1))
        out = jnp.zeros((B, NUM_CLASSES, topk, 5), jnp.float32)
        out = out.at[:, 1, :, :].set(kept)
        return out

    return detection_output


# --------------------------------------------------------------------------
# NumPy reference mirroring the torch forward (decode + threshold + ssd nms).
# --------------------------------------------------------------------------
def _reference_detection_output(loc, conf, pri, conf_threshold, nms_threshold,
                                variances, topk):
    loc = np.asarray(loc, np.float32)
    conf = np.asarray(conf, np.float32)
    pri = np.asarray(pri, np.float32)
    v0, v1 = np.float32(variances[0]), np.float32(variances[1])
    B, P, _ = loc.shape
    out = np.zeros((B, NUM_CLASSES, topk, 5), np.float32)
    for i in range(B):
        cxcy = pri[:, :2] + loc[i, :, :2] * v0 * pri[:, 2:]
        wh = pri[:, 2:] * np.exp(loc[i, :, 2:] * v1)
        mins = cxcy - wh / np.float32(2.0)
        maxs = wh + mins
        boxes = np.concatenate([mins, maxs], axis=1)
        scores_all = conf[i, :, 1]
        mask = scores_all > conf_threshold
        scores = scores_all[mask]
        if scores.size == 0:
            continue
        bbox = boxes[mask]
        x1, y1, x2, y2 = bbox[:, 0], bbox[:, 1], bbox[:, 2], bbox[:, 3]
        area = (x2 - x1) * (y2 - y1)
        order = np.argsort(scores, kind="stable")[-topk:]
        idx = list(order)
        keep = []
        while len(idx) > 0:
            j = int(idx[-1])
            keep.append(j)
            if len(idx) == 1:
                break
            rest = np.asarray(idx[:-1], dtype=np.int64)
            xx1 = np.maximum(x1[rest], x1[j])
            yy1 = np.maximum(y1[rest], y1[j])
            xx2 = np.minimum(x2[rest], x2[j])
            yy2 = np.minimum(y2[rest], y2[j])
            inter = np.clip(xx2 - xx1, 0, None) * np.clip(yy2 - yy1, 0, None)
            union = (area[rest] - inter) + area[j]
            iou = inter / union
            idx = list(rest[iou <= nms_threshold])
        count = len(keep)
        keep = np.asarray(keep, dtype=np.int64)
        out[i, 1, :count, 0] = scores[keep]
        out[i, 1, :count, 1:] = bbox[keep]
    return out


if __name__ == "__main__":
    B, P = 2, 256
    conf_threshold, nms_threshold, variances, topk = 0.5, 0.45, (0.1, 0.2), 10

    # priors: 16x16 grid of center-size boxes in [0,1], w = h = 0.2  (P = 256)
    g = 16
    xs = (np.arange(g, dtype=np.float32) + 0.5) / g
    cxg, cyg = np.meshgrid(xs, xs, indexing="xy")
    pri_np = np.stack([cxg.ravel(), cyg.ravel(),
                       np.full(P, 0.2, np.float32),
                       np.full(P, 0.2, np.float32)], axis=1).astype(np.float32)

    key = jax.random.PRNGKey(0)
    k1, k2 = jax.random.split(key)
    loc_data = 0.1 * jax.random.normal(k1, (B, P, 4), jnp.float32)
    conf_data = jax.random.normal(k2, (B, P, NUM_CLASSES), jnp.float32)
    priors = jnp.asarray(pri_np)

    detect = make_detection_output(conf_threshold, nms_threshold, variances, topk)
    out = detect(loc_data, conf_data, priors)
    out = jax.block_until_ready(out)

    ref = _reference_detection_output(np.asarray(loc_data), np.asarray(conf_data),
                                      pri_np, conf_threshold, nms_threshold,
                                      variances, topk)
    np.testing.assert_allclose(np.asarray(out), ref, rtol=1e-4, atol=1e-5)

    print("KERNEL_OK")
</pallas_src>

<mosaic_0001>
module attributes {stable_mosaic.version = 11 : i64} {
  func.func @_detection_kernel(%arg0: i32, %arg1: memref<1x4x256xf32, #tpu.memory_space<vmem>>, %arg2: memref<4x256xf32, #tpu.memory_space<vmem>>, %arg3: memref<1x1x256xf32, #tpu.memory_space<vmem>>, %arg4: memref<1x8x128xf32, #tpu.memory_space<vmem>>) attributes {dimension_semantics = [#tpu.dimension_semantics<parallel>], iteration_bounds = array<i64: 2>, scalar_prefetch = 0 : i64, scratch_operands = 0 : i64, tpu.core_type = #tpu.core_type<tc>, window_params = [{transform_indices = @transform_0, window_bounds = array<i64: 1, 4, 256>}, {pipeline_mode = #tpu.pipeline_mode<synchronous>, transform_indices = @transform_1, window_bounds = array<i64: 4, 256>}, {transform_indices = @transform_2, window_bounds = array<i64: 1, 1, 256>}, {transform_indices = @transform_3, window_bounds = array<i64: 1, 8, 128>}]} {
    %c0 = arith.constant 0 : index
    %c0_0 = arith.constant 0 : index
    %c0_1 = arith.constant 0 : index
    %0 = vector.load %arg1[%c0, %c0_0, %c0_1] : memref<1x4x256xf32, #tpu.memory_space<vmem>>, vector<1x4x256xf32>
    %1 = vector.shape_cast %0 : vector<1x4x256xf32> to vector<4x256xf32>
    %c0_2 = arith.constant 0 : index
    %c0_3 = arith.constant 0 : index
    %2 = vector.load %arg2[%c0_2, %c0_3] : memref<4x256xf32, #tpu.memory_space<vmem>>, vector<4x256xf32>
    %3 = vector.extract_strided_slice %2 {offsets = [0, 0], sizes = [1, 256], strides = [1, 1]} : vector<4x256xf32> to vector<1x256xf32>
    %4 = vector.extract_strided_slice %2 {offsets = [1, 0], sizes = [1, 256], strides = [1, 1]} : vector<4x256xf32> to vector<1x256xf32>
    %5 = vector.extract_strided_slice %2 {offsets = [2, 0], sizes = [1, 256], strides = [1, 1]} : vector<4x256xf32> to vector<1x256xf32>
    %6 = vector.extract_strided_slice %2 {offsets = [3, 0], sizes = [1, 256], strides = [1, 1]} : vector<4x256xf32> to vector<1x256xf32>
    %7 = vector.extract_strided_slice %1 {offsets = [0, 0], sizes = [1, 256], strides = [1, 1]} : vector<4x256xf32> to vector<1x256xf32>
    %8 = vector.extract_strided_slice %1 {offsets = [1, 0], sizes = [1, 256], strides = [1, 1]} : vector<4x256xf32> to vector<1x256xf32>
    %9 = vector.extract_strided_slice %1 {offsets = [2, 0], sizes = [1, 256], strides = [1, 1]} : vector<4x256xf32> to vector<1x256xf32>
    %10 = vector.extract_strided_slice %1 {offsets = [3, 0], sizes = [1, 256], strides = [1, 1]} : vector<4x256xf32> to vector<1x256xf32>
    %cst = arith.constant 1.000000e-01 : f32
    %11 = vector.broadcast %cst : f32 to vector<1x256xf32>
    %12 = arith.mulf %7, %11 : vector<1x256xf32>
    %13 = arith.mulf %12, %5 : vector<1x256xf32>
    %14 = arith.addf %3, %13 : vector<1x256xf32>
    %cst_4 = arith.constant 1.000000e-01 : f32
    %15 = vector.broadcast %cst_4 : f32 to vector<1x256xf32>
    %16 = arith.mulf %8, %15 : vector<1x256xf32>
    %17 = arith.mulf %16, %6 : vector<1x256xf32>
    %18 = arith.addf %4, %17 : vector<1x256xf32>
    %cst_5 = arith.constant 2.000000e-01 : f32
    %19 = vector.broadcast %cst_5 : f32 to vector<1x256xf32>
    %20 = arith.mulf %9, %19 : vector<1x256xf32>
    %21 = math.exp %20 : vector<1x256xf32>
    %22 = arith.mulf %5, %21 : vector<1x256xf32>
    %cst_6 = arith.constant 2.000000e-01 : f32
    %23 = vector.broadcast %cst_6 : f32 to vector<1x256xf32>
    %24 = arith.mulf %10, %23 : vector<1x256xf32>
    %25 = math.exp %24 : vector<1x256xf32>
    %26 = arith.mulf %6, %25 : vector<1x256xf32>
    %cst_7 = arith.constant 5.000000e-01 : f32
    %27 = vector.broadcast %cst_7 : f32 to vector<1x256xf32>
    %28 = arith.mulf %22, %27 : vector<1x256xf32>
    %29 = arith.subf %14, %28 : vector<1x256xf32>
    %cst_8 = arith.constant 5.000000e-01 : f32
    %30 = vector.broadcast %cst_8 : f32 to vector<1x256xf32>
    %31 = arith.mulf %26, %30 : vector<1x256xf32>
    %32 = arith.subf %18, %31 : vector<1x256xf32>
    %33 = arith.addf %22, %29 : vector<1x256xf32>
    %34 = arith.addf %26, %32 : vector<1x256xf32>
    %35 = arith.subf %33, %29 : vector<1x256xf32>
    %36 = arith.subf %34, %32 : vector<1x256xf32>
    %37 = arith.mulf %35, %36 : vector<1x256xf32>
    %c0_9 = arith.constant 0 : index
    %c0_10 = arith.constant 0 : index
    %c0_11 = arith.constant 0 : index
    %38 = vector.load %arg3[%c0_9, %c0_10, %c0_11] : memref<1x1x256xf32, #tpu.memory_space<vmem>>, vector<1x1x256xf32>
    %39 = vector.shape_cast %38 : vector<1x1x256xf32> to vector<1x256xf32>
    %cst_12 = arith.constant 5.000000e-01 : f32
    %40 = vector.broadcast %cst_12 : f32 to vector<1x256xf32>
    %41 = arith.cmpf ogt, %39, %40 : vector<1x256xf32>
    %cst_13 = arith.constant -1.000000e+30 : f32
    %42 = vector.broadcast %cst_13 : f32 to vector<1x256xf32>
    %43 = arith.select %41, %39, %42 : vector<1x256xi1>, vector<1x256xf32>
    %44 = tpu.iota {dimensions = array<i32: 1>} : vector<1x256xi32>
    %45 = arith.sitofp %44 : vector<1x256xi32> to vector<1x256xf32>
    %46 = tpu.concatenate %29, %32, %33, %34, %37 in 0 : vector<1x256xf32>, vector<1x256xf32>, vector<1x256xf32>, vector<1x256xf32>, vector<1x256xf32> -> vector<5x256xf32>
    %47 = tpu.iota {dimensions = array<i32: 1>} : vector<1x128xi32>
    %48 = arith.sitofp %47 : vector<1x128xi32> to vector<1x128xf32>
    %cst_14 = arith.constant 0.000000e+00 : f32
    %49 = vector.broadcast %cst_14 : f32 to vector<1x128xf32>
    %cst_15 = arith.constant 0.000000e+00 : f32
    %50 = vector.broadcast %cst_15 : f32 to vector<1x256xf32>
    %cst_16 = arith.constant -5.000000e+29 : f32
    %cst_17 = arith.constant 2.560000e+02 : f32
    %cst_18 = arith.constant -1.000000e+30 : f32
    %cst_19 = arith.constant 0.000000e+00 : f32
    %c0_i32 = arith.constant 0 : i32
    %51 = vector.shape_cast %43 : vector<1x256xf32> to vector<1x1x256xf32>
    %cst_20 = arith.constant dense<0xFF800000> : vector<1xf32>
    %52 = vector.multi_reduction <maximumf>, %51, %cst_20 [1, 2] : vector<1x1x256xf32> to vector<1xf32>
    %53 = vector.shape_cast %52 : vector<1xf32> to vector<1x1x1xf32>
    %54 = vector.extract %53[0, 0, 0] : f32 from vector<1x1x1xf32>
    %55 = arith.cmpf ogt, %54, %cst_16 : f32
    %56 = vector.broadcast %54 : f32 to vector<1x256xf32>
    %57 = arith.cmpf oeq, %43, %56 : vector<1x256xf32>
    %58 = vector.broadcast %cst_17 : f32 to vector<1x256xf32>
    %59 = arith.select %57, %45, %58 : vector<1x256xi1>, vector<1x256xf32>
    %60 = vector.shape_cast %59 : vector<1x256xf32> to vector<1x1x256xf32>
    %cst_21 = arith.constant dense<0x7F800000> : vector<1xf32>
    %61 = vector.multi_reduction <minimumf>, %60, %cst_21 [1, 2] : vector<1x1x256xf32> to vector<1xf32>
    %62 = vector.shape_cast %61 : vector<1xf32> to vector<1x1x1xf32>
    %63 = vector.extract %62[0, 0, 0] : f32 from vector<1x1x1xf32>
    %64 = vector.broadcast %63 : f32 to vector<1x256xf32>
    %65 = arith.cmpf oeq, %45, %64 : vector<1x256xf32>
    %66 = vector.broadcast %55 : i1 to vector<1x256xi1>
    %67 = arith.andi %65, %66 : vector<1x256xi1>
    %68 = vector.broadcast %cst_18 : f32 to vector<1x256xf32>
    %69 = arith.select %67, %68, %43 : vector<1x256xi1>, vector<1x256xf32>
    %cst_22 = arith.constant 0.000000e+00 : f32
    %70 = vector.broadcast %cst_22 : f32 to vector<1x256xf32>
    %71 = arith.select %67, %50, %70 : vector<1x256xi1>, vector<1x256xf32>
    %72 = vector.shape_cast %71 : vector<1x256xf32> to vector<1x1x256xf32>
    %cst_23 = arith.constant dense<0.000000e+00> : vector<1xf32>
    %73 = vector.multi_reduction <add>, %72, %cst_23 [1, 2] : vector<1x1x256xf32> to vector<1xf32>
    %74 = vector.shape_cast %73 : vector<1xf32> to vector<1x1x1xf32>
    %75 = vector.extract %74[0, 0, 0] : f32 from vector<1x1x1xf32>
    %cst_24 = arith.constant 5.000000e-01 : f32
    %76 = arith.cmpf olt, %75, %cst_24 : f32
    %77 = arith.andi %55, %76 : i1
    %cst_25 = arith.constant 0.000000e+00 : f32
    %78 = vector.shape_cast %67 : vector<1x256xi1> to vector<1x256xi1>
    %79 = vector.broadcast %78 : vector<1x256xi1> to vector<5x256xi1>
    %80 = vector.broadcast %cst_25 : f32 to vector<5x256xf32>
    %81 = arith.select %79, %46, %80 : vector<5x256xi1>, vector<5x256xf32>
    %cst_26 = arith.constant dense<0.000000e+00> : vector<5xf32>
    %82 = vector.multi_reduction <add>, %81, %cst_26 [1] : vector<5x256xf32> to vector<5xf32>
    %83 = vector.shape_cast %82 : vector<5xf32> to vector<5x1xf32>
    %84 = vector.extract_strided_slice %83 {offsets = [0, 0], sizes = [1, 1], strides = [1, 1]} : vector<5x1xf32> to vector<1x1xf32>
    %85 = vector.extract_strided_slice %83 {offsets = [1, 0], sizes = [1, 1], strides = [1, 1]} : vector<5x1xf32> to vector<1x1xf32>
    %86 = vector.extract_strided_slice %83 {offsets = [2, 0], sizes = [1, 1], strides = [1, 1]} : vector<5x1xf32> to vector<1x1xf32>
    %87 = vector.extract_strided_slice %83 {offsets = [3, 0], sizes = [1, 1], strides = [1, 1]} : vector<5x1xf32> to vector<1x1xf32>
    %88 = vector.extract_strided_slice %83 {offsets = [4, 0], sizes = [1, 1], strides = [1, 1]} : vector<5x1xf32> to vector<1x1xf32>
    %89 = vector.broadcast %cst_19 : f32 to vector<1x128xf32>
    %90 = arith.cmpf oeq, %48, %89 : vector<1x128xf32>
    %91 = vector.broadcast %77 : i1 to vector<1x128xi1>
    %92 = arith.andi %90, %91 : vector<1x128xi1>
    %93 = vector.broadcast %54 : f32 to vector<1x128xf32>
    %94 = arith.select %92, %93, %49 : vector<1x128xi1>, vector<1x128xf32>
    %95 = vector.shape_cast %84 : vector<1x1xf32> to vector<1x1xf32>
    %96 = vector.broadcast %95 : vector<1x1xf32> to vector<1x128xf32>
    %97 = arith.select %92, %96, %49 : vector<1x128xi1>, vector<1x128xf32>
    %98 = vector.shape_cast %85 : vector<1x1xf32> to vector<1x1xf32>
    %99 = vector.broadcast %98 : vector<1x1xf32> to vector<1x128xf32>
    %100 = arith.select %92, %99, %49 : vector<1x128xi1>, vector<1x128xf32>
    %101 = vector.shape_cast %86 : vector<1x1xf32> to vector<1x1xf32>
    %102 = vector.broadcast %101 : vector<1x1xf32> to vector<1x128xf32>
    %103 = arith.select %92, %102, %49 : vector<1x128xi1>, vector<1x128xf32>
    %104 = vector.shape_cast %87 : vector<1x1xf32> to vector<1x1xf32>
    %105 = vector.broadcast %104 : vector<1x1xf32> to vector<1x128xf32>
    %106 = arith.select %92, %105, %49 : vector<1x128xi1>, vector<1x128xf32>
    %107 = arith.extui %77 : i1 to i32
    %108 = arith.sitofp %107 : i32 to f32
    %109 = arith.addf %cst_19, %108 : f32
    %110 = vector.broadcast %84 : vector<1x1xf32> to vector<1x256xf32>
    %111 = arith.maximumf %29, %110 : vector<1x256xf32>
    %112 = vector.broadcast %85 : vector<1x1xf32> to vector<1x256xf32>
    %113 = arith.maximumf %32, %112 : vector<1x256xf32>
    %114 = vector.broadcast %86 : vector<1x1xf32> to vector<1x256xf32>
    %115 = arith.minimumf %33, %114 : vector<1x256xf32>
    %116 = vector.broadcast %87 : vector<1x1xf32> to vector<1x256xf32>
    %117 = arith.minimumf %34, %116 : vector<1x256xf32>
    %118 = arith.subf %115, %111 : vector<1x256xf32>
    %cst_27 = arith.constant 0.000000e+00 : f32
    %119 = vector.broadcast %cst_27 : f32 to vector<1x256xf32>
    %120 = arith.maximumf %118, %119 : vector<1x256xf32>
    %121 = arith.subf %117, %113 : vector<1x256xf32>
    %cst_28 = arith.constant 0.000000e+00 : f32
    %122 = vector.broadcast %cst_28 : f32 to vector<1x256xf32>
    %123 = arith.maximumf %121, %122 : vector<1x256xf32>
    %124 = arith.mulf %120, %123 : vector<1x256xf32>
    %125 = arith.subf %37, %124 : vector<1x256xf32>
    %126 = vector.broadcast %88 : vector<1x1xf32> to vector<1x256xf32>
    %127 = arith.addf %125, %126 : vector<1x256xf32>
    %128 = arith.divf %124, %127 : vector<1x256xf32>
    %cst_29 = arith.constant 4.500000e-01 : f32
    %129 = vector.broadcast %cst_29 : f32 to vector<1x256xf32>
    %130 = arith.cmpf ole, %128, %129 : vector<1x256xf32>
    %cst_30 = arith.constant dense<true> : vector<1x256xi1>
    %131 = arith.xori %130, %cst_30 : vector<1x256xi1>
    %132 = vector.broadcast %77 : i1 to vector<1x256xi1>
    %133 = arith.andi %132, %131 : vector<1x256xi1>
    %cst_31 = arith.constant 1.000000e+00 : f32
    %134 = vector.broadcast %cst_31 : f32 to vector<1x256xf32>
    %135 = arith.select %133, %134, %50 : vector<1x256xi1>, vector<1x256xf32>
    %c1_i32 = arith.constant 1 : i32
    %136 = vector.shape_cast %69 : vector<1x256xf32> to vector<1x1x256xf32>
    %cst_32 = arith.constant dense<0xFF800000> : vector<1xf32>
    %137 = vector.multi_reduction <maximumf>, %136, %cst_32 [1, 2] : vector<1x1x256xf32> to vector<1xf32>
    %138 = vector.shape_cast %137 : vector<1xf32> to vector<1x1x1xf32>
    %139 = vector.extract %138[0, 0, 0] : f32 from vector<1x1x1xf32>
    %140 = arith.cmpf ogt, %139, %cst_16 : f32
    %141 = vector.broadcast %139 : f32 to vector<1x256xf32>
    %142 = arith.cmpf oeq, %69, %141 : vector<1x256xf32>
    %143 = vector.broadcast %cst_17 : f32 to vector<1x256xf32>
    %144 = arith.select %142, %45, %143 : vector<1x256xi1>, vector<1x256xf32>
    %145 = vector.shape_cast %144 : vector<1x256xf32> to vector<1x1x256xf32>
    %cst_33 = arith.constant dense<0x7F800000> : vector<1xf32>
    %146 = vector.multi_reduction <minimumf>, %145, %cst_33 [1, 2] : vector<1x1x256xf32> to vector<1xf32>
    %147 = vector.shape_cast %146 : vector<1xf32> to vector<1x1x1xf32>
    %148 = vector.extract %147[0, 0, 0] : f32 from vector<1x1x1xf32>
    %149 = vector.broadcast %148 : f32 to vector<1x256xf32>
    %150 = arith.cmpf oeq, %45, %149 : vector<1x256xf32>
    %151 = vector.broadcast %140 : i1 to vector<1x256xi1>
    %152 = arith.andi %150, %151 : vector<1x256xi1>
    %153 = vector.broadcast %cst_18 : f32 to vector<1x256xf32>
    %154 = arith.select %152, %153, %69 : vector<1x256xi1>, vector<1x256xf32>
    %cst_34 = arith.constant 0.000000e+00 : f32
    %155 = vector.broadcast %cst_34 : f32 to vector<1x256xf32>
    %156 = arith.select %152, %135, %155 : vector<1x256xi1>, vector<1x256xf32>
    %157 = vector.shape_cast %156 : vector<1x256xf32> to vector<1x1x256xf32>
    %cst_35 = arith.constant dense<0.000000e+00> : vector<1xf32>
    %158 = vector.multi_reduction <add>, %157, %cst_35 [1, 2] : vector<1x1x256xf32> to vector<1xf32>
    %159 = vector.shape_cast %158 : vector<1xf32> to vector<1x1x1xf32>
    %160 = vector.extract %159[0, 0, 0] : f32 from vector<1x1x1xf32>
    %cst_36 = arith.constant 5.000000e-01 : f32
    %161 = arith.cmpf olt, %160, %cst_36 : f32
    %162 = arith.andi %140, %161 : i1
    %cst_37 = arith.constant 0.000000e+00 : f32
    %163 = vector.shape_cast %152 : vector<1x256xi1> to vector<1x256xi1>
    %164 = vector.broadcast %163 : vector<1x256xi1> to vector<5x256xi1>
    %165 = vector.broadcast %cst_37 : f32 to vector<5x256xf32>
    %166 = arith.select %164, %46, %165 : vector<5x256xi1>, vector<5x256xf32>
    %cst_38 = arith.constant dense<0.000000e+00> : vector<5xf32>
    %167 = vector.multi_reduction <add>, %166, %cst_38 [1] : vector<5x256xf32> to vector<5xf32>
    %168 = vector.shape_cast %167 : vector<5xf32> to vector<5x1xf32>
    %169 = vector.extract_strided_slice %168 {offsets = [0, 0], sizes = [1, 1], strides = [1, 1]} : vector<5x1xf32> to vector<1x1xf32>
    %170 = vector.extract_strided_slice %168 {offsets = [1, 0], sizes = [1, 1], strides = [1, 1]} : vector<5x1xf32> to vector<1x1xf32>
    %171 = vector.extract_strided_slice %168 {offsets = [2, 0], sizes = [1, 1], strides = [1, 1]} : vector<5x1xf32> to vector<1x1xf32>
    %172 = vector.extract_strided_slice %168 {offsets = [3, 0], sizes = [1, 1], strides = [1, 1]} : vector<5x1xf32> to vector<1x1xf32>
    %173 = vector.extract_strided_slice %168 {offsets = [4, 0], sizes = [1, 1], strides = [1, 1]} : vector<5x1xf32> to vector<1x1xf32>
    %174 = vector.broadcast %109 : f32 to vector<1x128xf32>
    %175 = arith.cmpf oeq, %48, %174 : vector<1x128xf32>
    %176 = vector.broadcast %162 : i1 to vector<1x128xi1>
    %177 = arith.andi %175, %176 : vector<1x128xi1>
    %178 = vector.broadcast %139 : f32 to vector<1x128xf32>
    %179 = arith.select %177, %178, %94 : vector<1x128xi1>, vector<1x128xf32>
    %180 = vector.shape_cast %169 : vector<1x1xf32> to vector<1x1xf32>
    %181 = vector.broadcast %180 : vector<1x1xf32> to vector<1x128xf32>
    %182 = arith.select %177, %181, %97 : vector<1x128xi1>, vector<1x128xf32>
    %183 = vector.shape_cast %170 : vector<1x1xf32> to vector<1x1xf32>
    %184 = vector.broadcast %183 : vector<1x1xf32> to vector<1x128xf32>
    %185 = arith.select %177, %184, %100 : vector<1x128xi1>, vector<1x128xf32>
    %186 = vector.shape_cast %171 : vector<1x1xf32> to vector<1x1xf32>
    %187 = vector.broadcast %186 : vector<1x1xf32> to vector<1x128xf32>
    %188 = arith.select %177, %187, %103 : vector<1x128xi1>, vector<1x128xf32>
    %189 = vector.shape_cast %172 : vector<1x1xf32> to vector<1x1xf32>
    %190 = vector.broadcast %189 : vector<1x1xf32> to vector<1x128xf32>
    %191 = arith.select %177, %190, %106 : vector<1x128xi1>, vector<1x128xf32>
    %192 = arith.extui %162 : i1 to i32
    %193 = arith.sitofp %192 : i32 to f32
    %194 = arith.addf %109, %193 : f32
    %195 = vector.broadcast %169 : vector<1x1xf32> to vector<1x256xf32>
    %196 = arith.maximumf %29, %195 : vector<1x256xf32>
    %197 = vector.broadcast %170 : vector<1x1xf32> to vector<1x256xf32>
    %198 = arith.maximumf %32, %197 : vector<1x256xf32>
    %199 = vector.broadcast %171 : vector<1x1xf32> to vector<1x256xf32>
    %200 = arith.minimumf %33, %199 : vector<1x256xf32>
    %201 = vector.broadcast %172 : vector<1x1xf32> to vector<1x256xf32>
    %202 = arith.minimumf %34, %201 : vector<1x256xf32>
    %203 = arith.subf %200, %196 : vector<1x256xf32>
    %cst_39 = arith.constant 0.000000e+00 : f32
    %204 = vector.broadcast %cst_39 : f32 to vector<1x256xf32>
    %205 = arith.maximumf %203, %204 : vector<1x256xf32>
    %206 = arith.subf %202, %198 : vector<1x256xf32>
    %cst_40 = arith.constant 0.000000e+00 : f32
    %207 = vector.broadcast %cst_40 : f32 to vector<1x256xf32>
    %208 = arith.maximumf %206, %207 : vector<1x256xf32>
    %209 = arith.mulf %205, %208 : vector<1x256xf32>
    %210 = arith.subf %37, %209 : vector<1x256xf32>
    %211 = vector.broadcast %173 : vector<1x1xf32> to vector<1x256xf32>
    %212 = arith.addf %210, %211 : vector<1x256xf32>
    %213 = arith.divf %209, %212 : vector<1x256xf32>
    %cst_41 = arith.constant 4.500000e-01 : f32
    %214 = vector.broadcast %cst_41 : f32 to vector<1x256xf32>
    %215 = arith.cmpf ole, %213, %214 : vector<1x256xf32>
    %cst_42 = arith.constant dense<true> : vector<1x256xi1>
    %216 = arith.xori %215, %cst_42 : vector<1x256xi1>
    %217 = vector.broadcast %162 : i1 to vector<1x256xi1>
    %218 = arith.andi %217, %216 : vector<1x256xi1>
    %cst_43 = arith.constant 1.000000e+00 : f32
    %219 = vector.broadcast %cst_43 : f32 to vector<1x256xf32>
    %220 = arith.select %218, %219, %135 : vector<1x256xi1>, vector<1x256xf32>
    %c2_i32 = arith.constant 2 : i32
    %221 = vector.shape_cast %154 : vector<1x256xf32> to vector<1x1x256xf32>
    %cst_44 = arith.constant dense<0xFF800000> : vector<1xf32>
    %222 = vector.multi_reduction <maximumf>, %221, %cst_44 [1, 2] : vector<1x1x256xf32> to vector<1xf32>
    %223 = vector.shape_cast %222 : vector<1xf32> to vector<1x1x1xf32>
    %224 = vector.extract %223[0, 0, 0] : f32 from vector<1x1x1xf32>
    %225 = arith.cmpf ogt, %224, %cst_16 : f32
    %226 = vector.broadcast %224 : f32 to vector<1x256xf32>
    %227 = arith.cmpf oeq, %154, %226 : vector<1x256xf32>
    %228 = vector.broadcast %cst_17 : f32 to vector<1x256xf32>
    %229 = arith.select %227, %45, %228 : vector<1x256xi1>, vector<1x256xf32>
    %230 = vector.shape_cast %229 : vector<1x256xf32> to vector<1x1x256xf32>
    %cst_45 = arith.constant dense<0x7F800000> : vector<1xf32>
    %231 = vector.multi_reduction <minimumf>, %230, %cst_45 [1, 2] : vector<1x1x256xf32> to vector<1xf32>
    %232 = vector.shape_cast %231 : vector<1xf32> to vector<1x1x1xf32>
    %233 = vector.extract %232[0, 0, 0] : f32 from vector<1x1x1xf32>
    %234 = vector.broadcast %233 : f32 to vector<1x256xf32>
    %235 = arith.cmpf oeq, %45, %234 : vector<1x256xf32>
    %236 = vector.broadcast %225 : i1 to vector<1x256xi1>
    %237 = arith.andi %235, %236 : vector<1x256xi1>
    %238 = vector.broadcast %cst_18 : f32 to vector<1x256xf32>
    %239 = arith.select %237, %238, %154 : vector<1x256xi1>, vector<1x256xf32>
    %cst_46 = arith.constant 0.000000e+00 : f32
    %240 = vector.broadcast %cst_46 : f32 to vector<1x256xf32>
    %241 = arith.select %237, %220, %240 : vector<1x256xi1>, vector<1x256xf32>
    %242 = vector.shape_cast %241 : vector<1x256xf32> to vector<1x1x256xf32>
    %cst_47 = arith.constant dense<0.000000e+00> : vector<1xf32>
    %243 = vector.multi_reduction <add>, %242, %cst_47 [1, 2] : vector<1x1x256xf32> to vector<1xf32>
    %244 = vector.shape_cast %243 : vector<1xf32> to vector<1x1x1xf32>
    %245 = vector.extract %244[0, 0, 0] : f32 from vector<1x1x1xf32>
    %cst_48 = arith.constant 5.000000e-01 : f32
    %246 = arith.cmpf olt, %245, %cst_48 : f32
    %247 = arith.andi %225, %246 : i1
    %cst_49 = arith.constant 0.000000e+00 : f32
    %248 = vector.shape_cast %237 : vector<1x256xi1> to vector<1x256xi1>
    %249 = vector.broadcast %248 : vector<1x256xi1> to vector<5x256xi1>
    %250 = vector.broadcast %cst_49 : f32 to vector<5x256xf32>
    %251 = arith.select %249, %46, %250 : vector<5x256xi1>, vector<5x256xf32>
    %cst_50 = arith.constant dense<0.000000e+00> : vector<5xf32>
    %252 = vector.multi_reduction <add>, %251, %cst_50 [1] : vector<5x256xf32> to vector<5xf32>
    %253 = vector.shape_cast %252 : vector<5xf32> to vector<5x1xf32>
    %254 = vector.extract_strided_slice %253 {offsets = [0, 0], sizes = [1, 1], strides = [1, 1]} : vector<5x1xf32> to vector<1x1xf32>
    %255 = vector.extract_strided_slice %253 {offsets = [1, 0], sizes = [1, 1], strides = [1, 1]} : vector<5x1xf32> to vector<1x1xf32>
    %256 = vector.extract_strided_slice %253 {offsets = [2, 0], sizes = [1, 1], strides = [1, 1]} : vector<5x1xf32> to vector<1x1xf32>
    %257 = vector.extract_strided_slice %253 {offsets = [3, 0], sizes = [1, 1], strides = [1, 1]} : vector<5x1xf32> to vector<1x1xf32>
    %258 = vector.extract_strided_slice %253 {offsets = [4, 0], sizes = [1, 1], strides = [1, 1]} : vector<5x1xf32> to vector<1x1xf32>
    %259 = vector.broadcast %194 : f32 to vector<1x128xf32>
    %260 = arith.cmpf oeq, %48, %259 : vector<1x128xf32>
    %261 = vector.broadcast %247 : i1 to vector<1x128xi1>
    %262 = arith.andi %260, %261 : vector<1x128xi1>
    %263 = vector.broadcast %224 : f32 to vector<1x128xf32>
    %264 = arith.select %262, %263, %179 : vector<1x128xi1>, vector<1x128xf32>
    %265 = vector.shape_cast %254 : vector<1x1xf32> to vector<1x1xf32>
    %266 = vector.broadcast %265 : vector<1x1xf32> to vector<1x128xf32>
    %267 = arith.select %262, %266, %182 : vector<1x128xi1>, vector<1x128xf32>
    %268 = vector.shape_cast %255 : vector<1x1xf32> to vector<1x1xf32>
    %269 = vector.broadcast %268 : vector<1x1xf32> to vector<1x128xf32>
    %270 = arith.select %262, %269, %185 : vector<1x128xi1>, vector<1x128xf32>
    %271 = vector.shape_cast %256 : vector<1x1xf32> to vector<1x1xf32>
    %272 = vector.broadcast %271 : vector<1x1xf32> to vector<1x128xf32>
    %273 = arith.select %262, %272, %188 : vector<1x128xi1>, vector<1x128xf32>
    %274 = vector.shape_cast %257 : vector<1x1xf32> to vector<1x1xf32>
    %275 = vector.broadcast %274 : vector<1x1xf32> to vector<1x128xf32>
    %276 = arith.select %262, %275, %191 : vector<1x128xi1>, vector<1x128xf32>
    %277 = arith.extui %247 : i1 to i32
    %278 = arith.sitofp %277 : i32 to f32
    %279 = arith.addf %194, %278 : f32
    %280 = vector.broadcast %254 : vector<1x1xf32> to vector<1x256xf32>
    %281 = arith.maximumf %29, %280 : vector<1x256xf32>
    %282 = vector.broadcast %255 : vector<1x1xf32> to vector<1x256xf32>
    %283 = arith.maximumf %32, %282 : vector<1x256xf32>
    %284 = vector.broadcast %256 : vector<1x1xf32> to vector<1x256xf32>
    %285 = arith.minimumf %33, %284 : vector<1x256xf32>
    %286 = vector.broadcast %257 : vector<1x1xf32> to vector<1x256xf32>
    %287 = arith.minimumf %34, %286 : vector<1x256xf32>
    %288 = arith.subf %285, %281 : vector<1x256xf32>
    %cst_51 = arith.constant 0.000000e+00 : f32
    %289 = vector.broadcast %cst_51 : f32 to vector<1x256xf32>
    %290 = arith.maximumf %288, %289 : vector<1x256xf32>
    %291 = arith.subf %287, %283 : vector<1x256xf32>
    %cst_52 = arith.constant 0.000000e+00 : f32
    %292 = vector.broadcast %cst_52 : f32 to vector<1x256xf32>
    %293 = arith.maximumf %291, %292 : vector<1x256xf32>
    %294 = arith.mulf %290, %293 : vector<1x256xf32>
    %295 = arith.subf %37, %294 : vector<1x256xf32>
    %296 = vector.broadcast %258 : vector<1x1xf32> to vector<1x256xf32>
    %297 = arith.addf %295, %296 : vector<1x256xf32>
    %298 = arith.divf %294, %297 : vector<1x256xf32>
    %cst_53 = arith.constant 4.500000e-01 : f32
    %299 = vector.broadcast %cst_53 : f32 to vector<1x256xf32>
    %300 = arith.cmpf ole, %298, %299 : vector<1x256xf32>
    %cst_54 = arith.constant dense<true> : vector<1x256xi1>
    %301 = arith.xori %300, %cst_54 : vector<1x256xi1>
    %302 = vector.broadcast %247 : i1 to vector<1x256xi1>
    %303 = arith.andi %302, %301 : vector<1x256xi1>
    %cst_55 = arith.constant 1.000000e+00 : f32
    %304 = vector.broadcast %cst_55 : f32 to vector<1x256xf32>
    %305 = arith.select %303, %304, %220 : vector<1x256xi1>, vector<1x256xf32>
    %c3_i32 = arith.constant 3 : i32
    %306 = vector.shape_cast %239 : vector<1x256xf32> to vector<1x1x256xf32>
    %cst_56 = arith.constant dense<0xFF800000> : vector<1xf32>
    %307 = vector.multi_reduction <maximumf>, %306, %cst_56 [1, 2] : vector<1x1x256xf32> to vector<1xf32>
    %308 = vector.shape_cast %307 : vector<1xf32> to vector<1x1x1xf32>
    %309 = vector.extract %308[0, 0, 0] : f32 from vector<1x1x1xf32>
    %310 = arith.cmpf ogt, %309, %cst_16 : f32
    %311 = vector.broadcast %309 : f32 to vector<1x256xf32>
    %312 = arith.cmpf oeq, %239, %311 : vector<1x256xf32>
    %313 = vector.broadcast %cst_17 : f32 to vector<1x256xf32>
    %314 = arith.select %312, %45, %313 : vector<1x256xi1>, vector<1x256xf32>
    %315 = vector.shape_cast %314 : vector<1x256xf32> to vector<1x1x256xf32>
    %cst_57 = arith.constant dense<0x7F800000> : vector<1xf32>
    %316 = vector.multi_reduction <minimumf>, %315, %cst_57 [1, 2] : vector<1x1x256xf32> to vector<1xf32>
    %317 = vector.shape_cast %316 : vector<1xf32> to vector<1x1x1xf32>
    %318 = vector.extract %317[0, 0, 0] : f32 from vector<1x1x1xf32>
    %319 = vector.broadcast %318 : f32 to vector<1x256xf32>
    %320 = arith.cmpf oeq, %45, %319 : vector<1x256xf32>
    %321 = vector.broadcast %310 : i1 to vector<1x256xi1>
    %322 = arith.andi %320, %321 : vector<1x256xi1>
    %323 = vector.broadcast %cst_18 : f32 to vector<1x256xf32>
    %324 = arith.select %322, %323, %239 : vector<1x256xi1>, vector<1x256xf32>
    %cst_58 = arith.constant 0.000000e+00 : f32
    %325 = vector.broadcast %cst_58 : f32 to vector<1x256xf32>
    %326 = arith.select %322, %305, %325 : vector<1x256xi1>, vector<1x256xf32>
    %327 = vector.shape_cast %326 : vector<1x256xf32> to vector<1x1x256xf32>
    %cst_59 = arith.constant dense<0.000000e+00> : vector<1xf32>
    %328 = vector.multi_reduction <add>, %327, %cst_59 [1, 2] : vector<1x1x256xf32> to vector<1xf32>
    %329 = vector.shape_cast %328 : vector<1xf32> to vector<1x1x1xf32>
    %330 = vector.extract %329[0, 0, 0] : f32 from vector<1x1x1xf32>
    %cst_60 = arith.constant 5.000000e-01 : f32
    %331 = arith.cmpf olt, %330, %cst_60 : f32
    %332 = arith.andi %310, %331 : i1
    %cst_61 = arith.constant 0.000000e+00 : f32
    %333 = vector.shape_cast %322 : vector<1x256xi1> to vector<1x256xi1>
    %334 = vector.broadcast %333 : vector<1x256xi1> to vector<5x256xi1>
    %335 = vector.broadcast %cst_61 : f32 to vector<5x256xf32>
    %336 = arith.select %334, %46, %335 : vector<5x256xi1>, vector<5x256xf32>
    %cst_62 = arith.constant dense<0.000000e+00> : vector<5xf32>
    %337 = vector.multi_reduction <add>, %336, %cst_62 [1] : vector<5x256xf32> to vector<5xf32>
    %338 = vector.shape_cast %337 : vector<5xf32> to vector<5x1xf32>
    %339 = vector.extract_strided_slice %338 {offsets = [0, 0], sizes = [1, 1], strides = [1, 1]} : vector<5x1xf32> to vector<1x1xf32>
    %340 = vector.extract_strided_slice %338 {offsets = [1, 0], sizes = [1, 1], strides = [1, 1]} : vector<5x1xf32> to vector<1x1xf32>
    %341 = vector.extract_strided_slice %338 {offsets = [2, 0], sizes = [1, 1], strides = [1, 1]} : vector<5x1xf32> to vector<1x1xf32>
    %342 = vector.extract_strided_slice %338 {offsets = [3, 0], sizes = [1, 1], strides = [1, 1]} : vector<5x1xf32> to vector<1x1xf32>
    %343 = vector.extract_strided_slice %338 {offsets = [4, 0], sizes = [1, 1], strides = [1, 1]} : vector<5x1xf32> to vector<1x1xf32>
    %344 = vector.broadcast %279 : f32 to vector<1x128xf32>
    %345 = arith.cmpf oeq, %48, %344 : vector<1x128xf32>
    %346 = vector.broadcast %332 : i1 to vector<1x128xi1>
    %347 = arith.andi %345, %346 : vector<1x128xi1>
    %348 = vector.broadcast %309 : f32 to vector<1x128xf32>
    %349 = arith.select %347, %348, %264 : vector<1x128xi1>, vector<1x128xf32>
    %350 = vector.shape_cast %339 : vector<1x1xf32> to vector<1x1xf32>
    %351 = vector.broadcast %350 : vector<1x1xf32> to vector<1x128xf32>
    %352 = arith.select %347, %351, %267 : vector<1x128xi1>, vector<1x128xf32>
    %353 = vector.shape_cast %340 : vector<1x1xf32> to vector<1x1xf32>
    %354 = vector.broadcast %353 : vector<1x1xf32> to vector<1x128xf32>
    %355 = arith.select %347, %354, %270 : vector<1x128xi1>, vector<1x128xf32>
    %356 = vector.shape_cast %341 : vector<1x1xf32> to vector<1x1xf32>
    %357 = vector.broadcast %356 : vector<1x1xf32> to vector<1x128xf32>
    %358 = arith.select %347, %357, %273 : vector<1x128xi1>, vector<1x128xf32>
    %359 = vector.shape_cast %342 : vector<1x1xf32> to vector<1x1xf32>
    %360 = vector.broadcast %359 : vector<1x1xf32> to vector<1x128xf32>
    %361 = arith.select %347, %360, %276 : vector<1x128xi1>, vector<1x128xf32>
    %362 = arith.extui %332 : i1 to i32
    %363 = arith.sitofp %362 : i32 to f32
    %364 = arith.addf %279, %363 : f32
    %365 = vector.broadcast %339 : vector<1x1xf32> to vector<1x256xf32>
    %366 = arith.maximumf %29, %365 : vector<1x256xf32>
    %367 = vector.broadcast %340 : vector<1x1xf32> to vector<1x256xf32>
    %368 = arith.maximumf %32, %367 : vector<1x256xf32>
    %369 = vector.broadcast %341 : vector<1x1xf32> to vector<1x256xf32>
    %370 = arith.minimumf %33, %369 : vector<1x256xf32>
    %371 = vector.broadcast %342 : vector<1x1xf32> to vector<1x256xf32>
    %372 = arith.minimumf %34, %371 : vector<1x256xf32>
    %373 = arith.subf %370, %366 : vector<1x256xf32>
    %cst_63 = arith.constant 0.000000e+00 : f32
    %374 = vector.broadcast %cst_63 : f32 to vector<1x256xf32>
    %375 = arith.maximumf %373, %374 : vector<1x256xf32>
    %376 = arith.subf %372, %368 : vector<1x256xf32>
    %cst_64 = arith.constant 0.000000e+00 : f32
    %377 = vector.broadcast %cst_64 : f32 to vector<1x256xf32>
    %378 = arith.maximumf %376, %377 : vector<1x256xf32>
    %379 = arith.mulf %375, %378 : vector<1x256xf32>
    %380 = arith.subf %37, %379 : vector<1x256xf32>
    %381 = vector.broadcast %343 : vector<1x1xf32> to vector<1x256xf32>
    %382 = arith.addf %380, %381 : vector<1x256xf32>
    %383 = arith.divf %379, %382 : vector<1x256xf32>
    %cst_65 = arith.constant 4.500000e-01 : f32
    %384 = vector.broadcast %cst_65 : f32 to vector<1x256xf32>
    %385 = arith.cmpf ole, %383, %384 : vector<1x256xf32>
    %cst_66 = arith.constant dense<true> : vector<1x256xi1>
    %386 = arith.xori %385, %cst_66 : vector<1x256xi1>
    %387 = vector.broadcast %332 : i1 to vector<1x256xi1>
    %388 = arith.andi %387, %386 : vector<1x256xi1>
    %cst_67 = arith.constant 1.000000e+00 : f32
    %389 = vector.broadcast %cst_67 : f32 to vector<1x256xf32>
    %390 = arith.select %388, %389, %305 : vector<1x256xi1>, vector<1x256xf32>
    %c4_i32 = arith.constant 4 : i32
    %391 = vector.shape_cast %324 : vector<1x256xf32> to vector<1x1x256xf32>
    %cst_68 = arith.constant dense<0xFF800000> : vector<1xf32>
    %392 = vector.multi_reduction <maximumf>, %391, %cst_68 [1, 2] : vector<1x1x256xf32> to vector<1xf32>
    %393 = vector.shape_cast %392 : vector<1xf32> to vector<1x1x1xf32>
    %394 = vector.extract %393[0, 0, 0] : f32 from vector<1x1x1xf32>
    %395 = arith.cmpf ogt, %394, %cst_16 : f32
    %396 = vector.broadcast %394 : f32 to vector<1x256xf32>
    %397 = arith.cmpf oeq, %324, %396 : vector<1x256xf32>
    %398 = vector.broadcast %cst_17 : f32 to vector<1x256xf32>
    %399 = arith.select %397, %45, %398 : vector<1x256xi1>, vector<1x256xf32>
    %400 = vector.shape_cast %399 : vector<1x256xf32> to vector<1x1x256xf32>
    %cst_69 = arith.constant dense<0x7F800000> : vector<1xf32>
    %401 = vector.multi_reduction <minimumf>, %400, %cst_69 [1, 2] : vector<1x1x256xf32> to vector<1xf32>
    %402 = vector.shape_cast %401 : vector<1xf32> to vector<1x1x1xf32>
    %403 = vector.extract %402[0, 0, 0] : f32 from vector<1x1x1xf32>
    %404 = vector.broadcast %403 : f32 to vector<1x256xf32>
    %405 = arith.cmpf oeq, %45, %404 : vector<1x256xf32>
    %406 = vector.broadcast %395 : i1 to vector<1x256xi1>
    %407 = arith.andi %405, %406 : vector<1x256xi1>
    %408 = vector.broadcast %cst_18 : f32 to vector<1x256xf32>
    %409 = arith.select %407, %408, %324 : vector<1x256xi1>, vector<1x256xf32>
    %cst_70 = arith.constant 0.000000e+00 : f32
    %410 = vector.broadcast %cst_70 : f32 to vector<1x256xf32>
    %411 = arith.select %407, %390, %410 : vector<1x256xi1>, vector<1x256xf32>
    %412 = vector.shape_cast %411 : vector<1x256xf32> to vector<1x1x256xf32>
    %cst_71 = arith.constant dense<0.000000e+00> : vector<1xf32>
    %413 = vector.multi_reduction <add>, %412, %cst_71 [1, 2] : vector<1x1x256xf32> to vector<1xf32>
    %414 = vector.shape_cast %413 : vector<1xf32> to vector<1x1x1xf32>
    %415 = vector.extract %414[0, 0, 0] : f32 from vector<1x1x1xf32>
    %cst_72 = arith.constant 5.000000e-01 : f32
    %416 = arith.cmpf olt, %415, %cst_72 : f32
    %417 = arith.andi %395, %416 : i1
    %cst_73 = arith.constant 0.000000e+00 : f32
    %418 = vector.shape_cast %407 : vector<1x256xi1> to vector<1x256xi1>
    %419 = vector.broadcast %418 : vector<1x256xi1> to vector<5x256xi1>
    %420 = vector.broadcast %cst_73 : f32 to vector<5x256xf32>
    %421 = arith.select %419, %46, %420 : vector<5x256xi1>, vector<5x256xf32>
    %cst_74 = arith.constant dense<0.000000e+00> : vector<5xf32>
    %422 = vector.multi_reduction <add>, %421, %cst_74 [1] : vector<5x256xf32> to vector<5xf32>
    %423 = vector.shape_cast %422 : vector<5xf32> to vector<5x1xf32>
    %424 = vector.extract_strided_slice %423 {offsets = [0, 0], sizes = [1, 1], strides = [1, 1]} : vector<5x1xf32> to vector<1x1xf32>
    %425 = vector.extract_strided_slice %423 {offsets = [1, 0], sizes = [1, 1], strides = [1, 1]} : vector<5x1xf32> to vector<1x1xf32>
    %426 = vector.extract_strided_slice %423 {offsets = [2, 0], sizes = [1, 1], strides = [1, 1]} : vector<5x1xf32> to vector<1x1xf32>
    %427 = vector.extract_strided_slice %423 {offsets = [3, 0], sizes = [1, 1], strides = [1, 1]} : vector<5x1xf32> to vector<1x1xf32>
    %428 = vector.extract_strided_slice %423 {offsets = [4, 0], sizes = [1, 1], strides = [1, 1]} : vector<5x1xf32> to vector<1x1xf32>
    %429 = vector.broadcast %364 : f32 to vector<1x128xf32>
    %430 = arith.cmpf oeq, %48, %429 : vector<1x128xf32>
    %431 = vector.broadcast %417 : i1 to vector<1x128xi1>
    %432 = arith.andi %430, %431 : vector<1x128xi1>
    %433 = vector.broadcast %394 : f32 to vector<1x128xf32>
    %434 = arith.select %432, %433, %349 : vector<1x128xi1>, vector<1x128xf32>
    %435 = vector.shape_cast %424 : vector<1x1xf32> to vector<1x1xf32>
    %436 = vector.broadcast %435 : vector<1x1xf32> to vector<1x128xf32>
    %437 = arith.select %432, %436, %352 : vector<1x128xi1>, vector<1x128xf32>
    %438 = vector.shape_cast %425 : vector<1x1xf32> to vector<1x1xf32>
    %439 = vector.broadcast %438 : vector<1x1xf32> to vector<1x128xf32>
    %440 = arith.select %432, %439, %355 : vector<1x128xi1>, vector<1x128xf32>
    %441 = vector.shape_cast %426 : vector<1x1xf32> to vector<1x1xf32>
    %442 = vector.broadcast %441 : vector<1x1xf32> to vector<1x128xf32>
    %443 = arith.select %432, %442, %358 : vector<1x128xi1>, vector<1x128xf32>
    %444 = vector.shape_cast %427 : vector<1x1xf32> to vector<1x1xf32>
    %445 = vector.broadcast %444 : vector<1x1xf32> to vector<1x128xf32>
    %446 = arith.select %432, %445, %361 : vector<1x128xi1>, vector<1x128xf32>
    %447 = arith.extui %417 : i1 to i32
    %448 = arith.sitofp %447 : i32 to f32
    %449 = arith.addf %364, %448 : f32
    %450 = vector.broadcast %424 : vector<1x1xf32> to vector<1x256xf32>
    %451 = arith.maximumf %29, %450 : vector<1x256xf32>
    %452 = vector.broadcast %425 : vector<1x1xf32> to vector<1x256xf32>
    %453 = arith.maximumf %32, %452 : vector<1x256xf32>
    %454 = vector.broadcast %426 : vector<1x1xf32> to vector<1x256xf32>
    %455 = arith.minimumf %33, %454 : vector<1x256xf32>
    %456 = vector.broadcast %427 : vector<1x1xf32> to vector<1x256xf32>
    %457 = arith.minimumf %34, %456 : vector<1x256xf32>
    %458 = arith.subf %455, %451 : vector<1x256xf32>
    %cst_75 = arith.constant 0.000000e+00 : f32
    %459 = vector.broadcast %cst_75 : f32 to vector<1x256xf32>
    %460 = arith.maximumf %458, %459 : vector<1x256xf32>
    %461 = arith.subf %457, %453 : vector<1x256xf32>
    %cst_76 = arith.constant 0.000000e+00 : f32
    %462 = vector.broadcast %cst_76 : f32 to vector<1x256xf32>
    %463 = arith.maximumf %461, %462 : vector<1x256xf32>
    %464 = arith.mulf %460, %463 : vector<1x256xf32>
    %465 = arith.subf %37, %464 : vector<1x256xf32>
    %466 = vector.broadcast %428 : vector<1x1xf32> to vector<1x256xf32>
    %467 = arith.addf %465, %466 : vector<1x256xf32>
    %468 = arith.divf %464, %467 : vector<1x256xf32>
    %cst_77 = arith.constant 4.500000e-01 : f32
    %469 = vector.broadcast %cst_77 : f32 to vector<1x256xf32>
    %470 = arith.cmpf ole, %468, %469 : vector<1x256xf32>
    %cst_78 = arith.constant dense<true> : vector<1x256xi1>
    %471 = arith.xori %470, %cst_78 : vector<1x256xi1>
    %472 = vector.broadcast %417 : i1 to vector<1x256xi1>
    %473 = arith.andi %472, %471 : vector<1x256xi1>
    %cst_79 = arith.constant 1.000000e+00 : f32
    %474 = vector.broadcast %cst_79 : f32 to vector<1x256xf32>
    %475 = arith.select %473, %474, %390 : vector<1x256xi1>, vector<1x256xf32>
    %c5_i32 = arith.constant 5 : i32
    %476 = vector.shape_cast %409 : vector<1x256xf32> to vector<1x1x256xf32>
    %cst_80 = arith.constant dense<0xFF800000> : vector<1xf32>
    %477 = vector.multi_reduction <maximumf>, %476, %cst_80 [1, 2] : vector<1x1x256xf32> to vector<1xf32>
    %478 = vector.shape_cast %477 : vector<1xf32> to vector<1x1x1xf32>
    %479 = vector.extract %478[0, 0, 0] : f32 from vector<1x1x1xf32>
    %480 = arith.cmpf ogt, %479, %cst_16 : f32
    %481 = vector.broadcast %479 : f32 to vector<1x256xf32>
    %482 = arith.cmpf oeq, %409, %481 : vector<1x256xf32>
    %483 = vector.broadcast %cst_17 : f32 to vector<1x256xf32>
    %484 = arith.select %482, %45, %483 : vector<1x256xi1>, vector<1x256xf32>
    %485 = vector.shape_cast %484 : vector<1x256xf32> to vector<1x1x256xf32>
    %cst_81 = arith.constant dense<0x7F800000> : vector<1xf32>
    %486 = vector.multi_reduction <minimumf>, %485, %cst_81 [1, 2] : vector<1x1x256xf32> to vector<1xf32>
    %487 = vector.shape_cast %486 : vector<1xf32> to vector<1x1x1xf32>
    %488 = vector.extract %487[0, 0, 0] : f32 from vector<1x1x1xf32>
    %489 = vector.broadcast %488 : f32 to vector<1x256xf32>
    %490 = arith.cmpf oeq, %45, %489 : vector<1x256xf32>
    %491 = vector.broadcast %480 : i1 to vector<1x256xi1>
    %492 = arith.andi %490, %491 : vector<1x256xi1>
    %493 = vector.broadcast %cst_18 : f32 to vector<1x256xf32>
    %494 = arith.select %492, %493, %409 : vector<1x256xi1>, vector<1x256xf32>
    %cst_82 = arith.constant 0.000000e+00 : f32
    %495 = vector.broadcast %cst_82 : f32 to vector<1x256xf32>
    %496 = arith.select %492, %475, %495 : vector<1x256xi1>, vector<1x256xf32>
    %497 = vector.shape_cast %496 : vector<1x256xf32> to vector<1x1x256xf32>
    %cst_83 = arith.constant dense<0.000000e+00> : vector<1xf32>
    %498 = vector.multi_reduction <add>, %497, %cst_83 [1, 2] : vector<1x1x256xf32> to vector<1xf32>
    %499 = vector.shape_cast %498 : vector<1xf32> to vector<1x1x1xf32>
    %500 = vector.extract %499[0, 0, 0] : f32 from vector<1x1x1xf32>
    %cst_84 = arith.constant 5.000000e-01 : f32
    %501 = arith.cmpf olt, %500, %cst_84 : f32
    %502 = arith.andi %480, %501 : i1
    %cst_85 = arith.constant 0.000000e+00 : f32
    %503 = vector.shape_cast %492 : vector<1x256xi1> to vector<1x256xi1>
    %504 = vector.broadcast %503 : vector<1x256xi1> to vector<5x256xi1>
    %505 = vector.broadcast %cst_85 : f32 to vector<5x256xf32>
    %506 = arith.select %504, %46, %505 : vector<5x256xi1>, vector<5x256xf32>
    %cst_86 = arith.constant dense<0.000000e+00> : vector<5xf32>
    %507 = vector.multi_reduction <add>, %506, %cst_86 [1] : vector<5x256xf32> to vector<5xf32>
    %508 = vector.shape_cast %507 : vector<5xf32> to vector<5x1xf32>
    %509 = vector.extract_strided_slice %508 {offsets = [0, 0], sizes = [1, 1], strides = [1, 1]} : vector<5x1xf32> to vector<1x1xf32>
    %510 = vector.extract_strided_slice %508 {offsets = [1, 0], sizes = [1, 1], strides = [1, 1]} : vector<5x1xf32> to vector<1x1xf32>
    %511 = vector.extract_strided_slice %508 {offsets = [2, 0], sizes = [1, 1], strides = [1, 1]} : vector<5x1xf32> to vector<1x1xf32>
    %512 = vector.extract_strided_slice %508 {offsets = [3, 0], sizes = [1, 1], strides = [1, 1]} : vector<5x1xf32> to vector<1x1xf32>
    %513 = vector.extract_strided_slice %508 {offsets = [4, 0], sizes = [1, 1], strides = [1, 1]} : vector<5x1xf32> to vector<1x1xf32>
    %514 = vector.broadcast %449 : f32 to vector<1x128xf32>
    %515 = arith.cmpf oeq, %48, %514 : vector<1x128xf32>
    %516 = vector.broadcast %502 : i1 to vector<1x128xi1>
    %517 = arith.andi %515, %516 : vector<1x128xi1>
    %518 = vector.broadcast %479 : f32 to vector<1x128xf32>
    %519 = arith.select %517, %518, %434 : vector<1x128xi1>, vector<1x128xf32>
    %520 = vector.shape_cast %509 : vector<1x1xf32> to vector<1x1xf32>
    %521 = vector.broadcast %520 : vector<1x1xf32> to vector<1x128xf32>
    %522 = arith.select %517, %521, %437 : vector<1x128xi1>, vector<1x128xf32>
    %523 = vector.shape_cast %510 : vector<1x1xf32> to vector<1x1xf32>
    %524 = vector.broadcast %523 : vector<1x1xf32> to vector<1x128xf32>
    %525 = arith.select %517, %524, %440 : vector<1x128xi1>, vector<1x128xf32>
    %526 = vector.shape_cast %511 : vector<1x1xf32> to vector<1x1xf32>
    %527 = vector.broadcast %526 : vector<1x1xf32> to vector<1x128xf32>
    %528 = arith.select %517, %527, %443 : vector<1x128xi1>, vector<1x128xf32>
    %529 = vector.shape_cast %512 : vector<1x1xf32> to vector<1x1xf32>
    %530 = vector.broadcast %529 : vector<1x1xf32> to vector<1x128xf32>
    %531 = arith.select %517, %530, %446 : vector<1x128xi1>, vector<1x128xf32>
    %532 = arith.extui %502 : i1 to i32
    %533 = arith.sitofp %532 : i32 to f32
    %534 = arith.addf %449, %533 : f32
    %535 = vector.broadcast %509 : vector<1x1xf32> to vector<1x256xf32>
    %536 = arith.maximumf %29, %535 : vector<1x256xf32>
    %537 = vector.broadcast %510 : vector<1x1xf32> to vector<1x256xf32>
    %538 = arith.maximumf %32, %537 : vector<1x256xf32>
    %539 = vector.broadcast %511 : vector<1x1xf32> to vector<1x256xf32>
    %540 = arith.minimumf %33, %539 : vector<1x256xf32>
    %541 = vector.broadcast %512 : vector<1x1xf32> to vector<1x256xf32>
    %542 = arith.minimumf %34, %541 : vector<1x256xf32>
    %543 = arith.subf %540, %536 : vector<1x256xf32>
    %cst_87 = arith.constant 0.000000e+00 : f32
    %544 = vector.broadcast %cst_87 : f32 to vector<1x256xf32>
    %545 = arith.maximumf %543, %544 : vector<1x256xf32>
    %546 = arith.subf %542, %538 : vector<1x256xf32>
    %cst_88 = arith.constant 0.000000e+00 : f32
    %547 = vector.broadcast %cst_88 : f32 to vector<1x256xf32>
    %548 = arith.maximumf %546, %547 : vector<1x256xf32>
    %549 = arith.mulf %545, %548 : vector<1x256xf32>
    %550 = arith.subf %37, %549 : vector<1x256xf32>
    %551 = vector.broadcast %513 : vector<1x1xf32> to vector<1x256xf32>
    %552 = arith.addf %550, %551 : vector<1x256xf32>
    %553 = arith.divf %549, %552 : vector<1x256xf32>
    %cst_89 = arith.constant 4.500000e-01 : f32
    %554 = vector.broadcast %cst_89 : f32 to vector<1x256xf32>
    %555 = arith.cmpf ole, %553, %554 : vector<1x256xf32>
    %cst_90 = arith.constant dense<true> : vector<1x256xi1>
    %556 = arith.xori %555, %cst_90 : vector<1x256xi1>
    %557 = vector.broadcast %502 : i1 to vector<1x256xi1>
    %558 = arith.andi %557, %556 : vector<1x256xi1>
    %cst_91 = arith.constant 1.000000e+00 : f32
    %559 = vector.broadcast %cst_91 : f32 to vector<1x256xf32>
    %560 = arith.select %558, %559, %475 : vector<1x256xi1>, vector<1x256xf32>
    %c6_i32 = arith.constant 6 : i32
    %561 = vector.shape_cast %494 : vector<1x256xf32> to vector<1x1x256xf32>
    %cst_92 = arith.constant dense<0xFF800000> : vector<1xf32>
    %562 = vector.multi_reduction <maximumf>, %561, %cst_92 [1, 2] : vector<1x1x256xf32> to vector<1xf32>
    %563 = vector.shape_cast %562 : vector<1xf32> to vector<1x1x1xf32>
    %564 = vector.extract %563[0, 0, 0] : f32 from vector<1x1x1xf32>
    %565 = arith.cmpf ogt, %564, %cst_16 : f32
    %566 = vector.broadcast %564 : f32 to vector<1x256xf32>
    %567 = arith.cmpf oeq, %494, %566 : vector<1x256xf32>
    %568 = vector.broadcast %cst_17 : f32 to vector<1x256xf32>
    %569 = arith.select %567, %45, %568 : vector<1x256xi1>, vector<1x256xf32>
    %570 = vector.shape_cast %569 : vector<1x256xf32> to vector<1x1x256xf32>
    %cst_93 = arith.constant dense<0x7F800000> : vector<1xf32>
    %571 = vector.multi_reduction <minimumf>, %570, %cst_93 [1, 2] : vector<1x1x256xf32> to vector<1xf32>
    %572 = vector.shape_cast %571 : vector<1xf32> to vector<1x1x1xf32>
    %573 = vector.extract %572[0, 0, 0] : f32 from vector<1x1x1xf32>
    %574 = vector.broadcast %573 : f32 to vector<1x256xf32>
    %575 = arith.cmpf oeq, %45, %574 : vector<1x256xf32>
    %576 = vector.broadcast %565 : i1 to vector<1x256xi1>
    %577 = arith.andi %575, %576 : vector<1x256xi1>
    %578 = vector.broadcast %cst_18 : f32 to vector<1x256xf32>
    %579 = arith.select %577, %578, %494 : vector<1x256xi1>, vector<1x256xf32>
    %cst_94 = arith.constant 0.000000e+00 : f32
    %580 = vector.broadcast %cst_94 : f32 to vector<1x256xf32>
    %581 = arith.select %577, %560, %580 : vector<1x256xi1>, vector<1x256xf32>
    %582 = vector.shape_cast %581 : vector<1x256xf32> to vector<1x1x256xf32>
    %cst_95 = arith.constant dense<0.000000e+00> : vector<1xf32>
    %583 = vector.multi_reduction <add>, %582, %cst_95 [1, 2] : vector<1x1x256xf32> to vector<1xf32>
    %584 = vector.shape_cast %583 : vector<1xf32> to vector<1x1x1xf32>
    %585 = vector.extract %584[0, 0, 0] : f32 from vector<1x1x1xf32>
    %cst_96 = arith.constant 5.000000e-01 : f32
    %586 = arith.cmpf olt, %585, %cst_96 : f32
    %587 = arith.andi %565, %586 : i1
    %cst_97 = arith.constant 0.000000e+00 : f32
    %588 = vector.shape_cast %577 : vector<1x256xi1> to vector<1x256xi1>
    %589 = vector.broadcast %588 : vector<1x256xi1> to vector<5x256xi1>
    %590 = vector.broadcast %cst_97 : f32 to vector<5x256xf32>
    %591 = arith.select %589, %46, %590 : vector<5x256xi1>, vector<5x256xf32>
    %cst_98 = arith.constant dense<0.000000e+00> : vector<5xf32>
    %592 = vector.multi_reduction <add>, %591, %cst_98 [1] : vector<5x256xf32> to vector<5xf32>
    %593 = vector.shape_cast %592 : vector<5xf32> to vector<5x1xf32>
    %594 = vector.extract_strided_slice %593 {offsets = [0, 0], sizes = [1, 1], strides = [1, 1]} : vector<5x1xf32> to vector<1x1xf32>
    %595 = vector.extract_strided_slice %593 {offsets = [1, 0], sizes = [1, 1], strides = [1, 1]} : vector<5x1xf32> to vector<1x1xf32>
    %596 = vector.extract_strided_slice %593 {offsets = [2, 0], sizes = [1, 1], strides = [1, 1]} : vector<5x1xf32> to vector<1x1xf32>
    %597 = vector.extract_strided_slice %593 {offsets = [3, 0], sizes = [1, 1], strides = [1, 1]} : vector<5x1xf32> to vector<1x1xf32>
    %598 = vector.extract_strided_slice %593 {offsets = [4, 0], sizes = [1, 1], strides = [1, 1]} : vector<5x1xf32> to vector<1x1xf32>
    %599 = vector.broadcast %534 : f32 to vector<1x128xf32>
    %600 = arith.cmpf oeq, %48, %599 : vector<1x128xf32>
    %601 = vector.broadcast %587 : i1 to vector<1x128xi1>
    %602 = arith.andi %600, %601 : vector<1x128xi1>
    %603 = vector.broadcast %564 : f32 to vector<1x128xf32>
    %604 = arith.select %602, %603, %519 : vector<1x128xi1>, vector<1x128xf32>
    %605 = vector.shape_cast %594 : vector<1x1xf32> to vector<1x1xf32>
    %606 = vector.broadcast %605 : vector<1x1xf32> to vector<1x128xf32>
    %607 = arith.select %602, %606, %522 : vector<1x128xi1>, vector<1x128xf32>
    %608 = vector.shape_cast %595 : vector<1x1xf32> to vector<1x1xf32>
    %609 = vector.broadcast %608 : vector<1x1xf32> to vector<1x128xf32>
    %610 = arith.select %602, %609, %525 : vector<1x128xi1>, vector<1x128xf32>
    %611 = vector.shape_cast %596 : vector<1x1xf32> to vector<1x1xf32>
    %612 = vector.broadcast %611 : vector<1x1xf32> to vector<1x128xf32>
    %613 = arith.select %602, %612, %528 : vector<1x128xi1>, vector<1x128xf32>
    %614 = vector.shape_cast %597 : vector<1x1xf32> to vector<1x1xf32>
    %615 = vector.broadcast %614 : vector<1x1xf32> to vector<1x128xf32>
    %616 = arith.select %602, %615, %531 : vector<1x128xi1>, vector<1x128xf32>
    %617 = arith.extui %587 : i1 to i32
    %618 = arith.sitofp %617 : i32 to f32
    %619 = arith.addf %534, %618 : f32
    %620 = vector.broadcast %594 : vector<1x1xf32> to vector<1x256xf32>
    %621 = arith.maximumf %29, %620 : vector<1x256xf32>
    %622 = vector.broadcast %595 : vector<1x1xf32> to vector<1x256xf32>
    %623 = arith.maximumf %32, %622 : vector<1x256xf32>
    %624 = vector.broadcast %596 : vector<1x1xf32> to vector<1x256xf32>
    %625 = arith.minimumf %33, %624 : vector<1x256xf32>
    %626 = vector.broadcast %597 : vector<1x1xf32> to vector<1x256xf32>
    %627 = arith.minimumf %34, %626 : vector<1x256xf32>
    %628 = arith.subf %625, %621 : vector<1x256xf32>
    %cst_99 = arith.constant 0.000000e+00 : f32
    %629 = vector.broadcast %cst_99 : f32 to vector<1x256xf32>
    %630 = arith.maximumf %628, %629 : vector<1x256xf32>
    %631 = arith.subf %627, %623 : vector<1x256xf32>
    %cst_100 = arith.constant 0.000000e+00 : f32
    %632 = vector.broadcast %cst_100 : f32 to vector<1x256xf32>
    %633 = arith.maximumf %631, %632 : vector<1x256xf32>
    %634 = arith.mulf %630, %633 : vector<1x256xf32>
    %635 = arith.subf %37, %634 : vector<1x256xf32>
    %636 = vector.broadcast %598 : vector<1x1xf32> to vector<1x256xf32>
    %637 = arith.addf %635, %636 : vector<1x256xf32>
    %638 = arith.divf %634, %637 : vector<1x256xf32>
    %cst_101 = arith.constant 4.500000e-01 : f32
    %639 = vector.broadcast %cst_101 : f32 to vector<1x256xf32>
    %640 = arith.cmpf ole, %638, %639 : vector<1x256xf32>
    %cst_102 = arith.constant dense<true> : vector<1x256xi1>
    %641 = arith.xori %640, %cst_102 : vector<1x256xi1>
    %642 = vector.broadcast %587 : i1 to vector<1x256xi1>
    %643 = arith.andi %642, %641 : vector<1x256xi1>
    %cst_103 = arith.constant 1.000000e+00 : f32
    %644 = vector.broadcast %cst_103 : f32 to vector<1x256xf32>
    %645 = arith.select %643, %644, %560 : vector<1x256xi1>, vector<1x256xf32>
    %c7_i32 = arith.constant 7 : i32
    %646 = vector.shape_cast %579 : vector<1x256xf32> to vector<1x1x256xf32>
    %cst_104 = arith.constant dense<0xFF800000> : vector<1xf32>
    %647 = vector.multi_reduction <maximumf>, %646, %cst_104 [1, 2] : vector<1x1x256xf32> to vector<1xf32>
    %648 = vector.shape_cast %647 : vector<1xf32> to vector<1x1x1xf32>
    %649 = vector.extract %648[0, 0, 0] : f32 from vector<1x1x1xf32>
    %650 = arith.cmpf ogt, %649, %cst_16 : f32
    %651 = vector.broadcast %649 : f32 to vector<1x256xf32>
    %652 = arith.cmpf oeq, %579, %651 : vector<1x256xf32>
    %653 = vector.broadcast %cst_17 : f32 to vector<1x256xf32>
    %654 = arith.select %652, %45, %653 : vector<1x256xi1>, vector<1x256xf32>
    %655 = vector.shape_cast %654 : vector<1x256xf32> to vector<1x1x256xf32>
    %cst_105 = arith.constant dense<0x7F800000> : vector<1xf32>
    %656 = vector.multi_reduction <minimumf>, %655, %cst_105 [1, 2] : vector<1x1x256xf32> to vector<1xf32>
    %657 = vector.shape_cast %656 : vector<1xf32> to vector<1x1x1xf32>
    %658 = vector.extract %657[0, 0, 0] : f32 from vector<1x1x1xf32>
    %659 = vector.broadcast %658 : f32 to vector<1x256xf32>
    %660 = arith.cmpf oeq, %45, %659 : vector<1x256xf32>
    %661 = vector.broadcast %650 : i1 to vector<1x256xi1>
    %662 = arith.andi %660, %661 : vector<1x256xi1>
    %663 = vector.broadcast %cst_18 : f32 to vector<1x256xf32>
    %664 = arith.select %662, %663, %579 : vector<1x256xi1>, vector<1x256xf32>
    %cst_106 = arith.constant 0.000000e+00 : f32
    %665 = vector.broadcast %cst_106 : f32 to vector<1x256xf32>
    %666 = arith.select %662, %645, %665 : vector<1x256xi1>, vector<1x256xf32>
    %667 = vector.shape_cast %666 : vector<1x256xf32> to vector<1x1x256xf32>
    %cst_107 = arith.constant dense<0.000000e+00> : vector<1xf32>
    %668 = vector.multi_reduction <add>, %667, %cst_107 [1, 2] : vector<1x1x256xf32> to vector<1xf32>
    %669 = vector.shape_cast %668 : vector<1xf32> to vector<1x1x1xf32>
    %670 = vector.extract %669[0, 0, 0] : f32 from vector<1x1x1xf32>
    %cst_108 = arith.constant 5.000000e-01 : f32
    %671 = arith.cmpf olt, %670, %cst_108 : f32
    %672 = arith.andi %650, %671 : i1
    %cst_109 = arith.constant 0.000000e+00 : f32
    %673 = vector.shape_cast %662 : vector<1x256xi1> to vector<1x256xi1>
    %674 = vector.broadcast %673 : vector<1x256xi1> to vector<5x256xi1>
    %675 = vector.broadcast %cst_109 : f32 to vector<5x256xf32>
    %676 = arith.select %674, %46, %675 : vector<5x256xi1>, vector<5x256xf32>
    %cst_110 = arith.constant dense<0.000000e+00> : vector<5xf32>
    %677 = vector.multi_reduction <add>, %676, %cst_110 [1] : vector<5x256xf32> to vector<5xf32>
    %678 = vector.shape_cast %677 : vector<5xf32> to vector<5x1xf32>
    %679 = vector.extract_strided_slice %678 {offsets = [0, 0], sizes = [1, 1], strides = [1, 1]} : vector<5x1xf32> to vector<1x1xf32>
    %680 = vector.extract_strided_slice %678 {offsets = [1, 0], sizes = [1, 1], strides = [1, 1]} : vector<5x1xf32> to vector<1x1xf32>
    %681 = vector.extract_strided_slice %678 {offsets = [2, 0], sizes = [1, 1], strides = [1, 1]} : vector<5x1xf32> to vector<1x1xf32>
    %682 = vector.extract_strided_slice %678 {offsets = [3, 0], sizes = [1, 1], strides = [1, 1]} : vector<5x1xf32> to vector<1x1xf32>
    %683 = vector.extract_strided_slice %678 {offsets = [4, 0], sizes = [1, 1], strides = [1, 1]} : vector<5x1xf32> to vector<1x1xf32>
    %684 = vector.broadcast %619 : f32 to vector<1x128xf32>
    %685 = arith.cmpf oeq, %48, %684 : vector<1x128xf32>
    %686 = vector.broadcast %672 : i1 to vector<1x128xi1>
    %687 = arith.andi %685, %686 : vector<1x128xi1>
    %688 = vector.broadcast %649 : f32 to vector<1x128xf32>
    %689 = arith.select %687, %688, %604 : vector<1x128xi1>, vector<1x128xf32>
    %690 = vector.shape_cast %679 : vector<1x1xf32> to vector<1x1xf32>
    %691 = vector.broadcast %690 : vector<1x1xf32> to vector<1x128xf32>
    %692 = arith.select %687, %691, %607 : vector<1x128xi1>, vector<1x128xf32>
    %693 = vector.shape_cast %680 : vector<1x1xf32> to vector<1x1xf32>
    %694 = vector.broadcast %693 : vector<1x1xf32> to vector<1x128xf32>
    %695 = arith.select %687, %694, %610 : vector<1x128xi1>, vector<1x128xf32>
    %696 = vector.shape_cast %681 : vector<1x1xf32> to vector<1x1xf32>
    %697 = vector.broadcast %696 : vector<1x1xf32> to vector<1x128xf32>
    %698 = arith.select %687, %697, %613 : vector<1x128xi1>, vector<1x128xf32>
    %699 = vector.shape_cast %682 : vector<1x1xf32> to vector<1x1xf32>
    %700 = vector.broadcast %699 : vector<1x1xf32> to vector<1x128xf32>
    %701 = arith.select %687, %700, %616 : vector<1x128xi1>, vector<1x128xf32>
    %702 = arith.extui %672 : i1 to i32
    %703 = arith.sitofp %702 : i32 to f32
    %704 = arith.addf %619, %703 : f32
    %705 = vector.broadcast %679 : vector<1x1xf32> to vector<1x256xf32>
    %706 = arith.maximumf %29, %705 : vector<1x256xf32>
    %707 = vector.broadcast %680 : vector<1x1xf32> to vector<1x256xf32>
    %708 = arith.maximumf %32, %707 : vector<1x256xf32>
    %709 = vector.broadcast %681 : vector<1x1xf32> to vector<1x256xf32>
    %710 = arith.minimumf %33, %709 : vector<1x256xf32>
    %711 = vector.broadcast %682 : vector<1x1xf32> to vector<1x256xf32>
    %712 = arith.minimumf %34, %711 : vector<1x256xf32>
    %713 = arith.subf %710, %706 : vector<1x256xf32>
    %cst_111 = arith.constant 0.000000e+00 : f32
    %714 = vector.broadcast %cst_111 : f32 to vector<1x256xf32>
    %715 = arith.maximumf %713, %714 : vector<1x256xf32>
    %716 = arith.subf %712, %708 : vector<1x256xf32>
    %cst_112 = arith.constant 0.000000e+00 : f32
    %717 = vector.broadcast %cst_112 : f32 to vector<1x256xf32>
    %718 = arith.maximumf %716, %717 : vector<1x256xf32>
    %719 = arith.mulf %715, %718 : vector<1x256xf32>
    %720 = arith.subf %37, %719 : vector<1x256xf32>
    %721 = vector.broadcast %683 : vector<1x1xf32> to vector<1x256xf32>
    %722 = arith.addf %720, %721 : vector<1x256xf32>
    %723 = arith.divf %719, %722 : vector<1x256xf32>
    %cst_113 = arith.constant 4.500000e-01 : f32
    %724 = vector.broadcast %cst_113 : f32 to vector<1x256xf32>
    %725 = arith.cmpf ole, %723, %724 : vector<1x256xf32>
    %cst_114 = arith.constant dense<true> : vector<1x256xi1>
    %726 = arith.xori %725, %cst_114 : vector<1x256xi1>
    %727 = vector.broadcast %672 : i1 to vector<1x256xi1>
    %728 = arith.andi %727, %726 : vector<1x256xi1>
    %cst_115 = arith.constant 1.000000e+00 : f32
    %729 = vector.broadcast %cst_115 : f32 to vector<1x256xf32>
    %730 = arith.select %728, %729, %645 : vector<1x256xi1>, vector<1x256xf32>
    %c8_i32 = arith.constant 8 : i32
    %731 = vector.shape_cast %664 : vector<1x256xf32> to vector<1x1x256xf32>
    %cst_116 = arith.constant dense<0xFF800000> : vector<1xf32>
    %732 = vector.multi_reduction <maximumf>, %731, %cst_116 [1, 2] : vector<1x1x256xf32> to vector<1xf32>
    %733 = vector.shape_cast %732 : vector<1xf32> to vector<1x1x1xf32>
    %734 = vector.extract %733[0, 0, 0] : f32 from vector<1x1x1xf32>
    %735 = arith.cmpf ogt, %734, %cst_16 : f32
    %736 = vector.broadcast %734 : f32 to vector<1x256xf32>
    %737 = arith.cmpf oeq, %664, %736 : vector<1x256xf32>
    %738 = vector.broadcast %cst_17 : f32 to vector<1x256xf32>
    %739 = arith.select %737, %45, %738 : vector<1x256xi1>, vector<1x256xf32>
    %740 = vector.shape_cast %739 : vector<1x256xf32> to vector<1x1x256xf32>
    %cst_117 = arith.constant dense<0x7F800000> : vector<1xf32>
    %741 = vector.multi_reduction <minimumf>, %740, %cst_117 [1, 2] : vector<1x1x256xf32> to vector<1xf32>
    %742 = vector.shape_cast %741 : vector<1xf32> to vector<1x1x1xf32>
    %743 = vector.extract %742[0, 0, 0] : f32 from vector<1x1x1xf32>
    %744 = vector.broadcast %743 : f32 to vector<1x256xf32>
    %745 = arith.cmpf oeq, %45, %744 : vector<1x256xf32>
    %746 = vector.broadcast %735 : i1 to vector<1x256xi1>
    %747 = arith.andi %745, %746 : vector<1x256xi1>
    %748 = vector.broadcast %cst_18 : f32 to vector<1x256xf32>
    %749 = arith.select %747, %748, %664 : vector<1x256xi1>, vector<1x256xf32>
    %cst_118 = arith.constant 0.000000e+00 : f32
    %750 = vector.broadcast %cst_118 : f32 to vector<1x256xf32>
    %751 = arith.select %747, %730, %750 : vector<1x256xi1>, vector<1x256xf32>
    %752 = vector.shape_cast %751 : vector<1x256xf32> to vector<1x1x256xf32>
    %cst_119 = arith.constant dense<0.000000e+00> : vector<1xf32>
    %753 = vector.multi_reduction <add>, %752, %cst_119 [1, 2] : vector<1x1x256xf32> to vector<1xf32>
    %754 = vector.shape_cast %753 : vector<1xf32> to vector<1x1x1xf32>
    %755 = vector.extract %754[0, 0, 0] : f32 from vector<1x1x1xf32>
    %cst_120 = arith.constant 5.000000e-01 : f32
    %756 = arith.cmpf olt, %755, %cst_120 : f32
    %757 = arith.andi %735, %756 : i1
    %cst_121 = arith.constant 0.000000e+00 : f32
    %758 = vector.shape_cast %747 : vector<1x256xi1> to vector<1x256xi1>
    %759 = vector.broadcast %758 : vector<1x256xi1> to vector<5x256xi1>
    %760 = vector.broadcast %cst_121 : f32 to vector<5x256xf32>
    %761 = arith.select %759, %46, %760 : vector<5x256xi1>, vector<5x256xf32>
    %cst_122 = arith.constant dense<0.000000e+00> : vector<5xf32>
    %762 = vector.multi_reduction <add>, %761, %cst_122 [1] : vector<5x256xf32> to vector<5xf32>
    %763 = vector.shape_cast %762 : vector<5xf32> to vector<5x1xf32>
    %764 = vector.extract_strided_slice %763 {offsets = [0, 0], sizes = [1, 1], strides = [1, 1]} : vector<5x1xf32> to vector<1x1xf32>
    %765 = vector.extract_strided_slice %763 {offsets = [1, 0], sizes = [1, 1], strides = [1, 1]} : vector<5x1xf32> to vector<1x1xf32>
    %766 = vector.extract_strided_slice %763 {offsets = [2, 0], sizes = [1, 1], strides = [1, 1]} : vector<5x1xf32> to vector<1x1xf32>
    %767 = vector.extract_strided_slice %763 {offsets = [3, 0], sizes = [1, 1], strides = [1, 1]} : vector<5x1xf32> to vector<1x1xf32>
    %768 = vector.extract_strided_slice %763 {offsets = [4, 0], sizes = [1, 1], strides = [1, 1]} : vector<5x1xf32> to vector<1x1xf32>
    %769 = vector.broadcast %704 : f32 to vector<1x128xf32>
    %770 = arith.cmpf oeq, %48, %769 : vector<1x128xf32>
    %771 = vector.broadcast %757 : i1 to vector<1x128xi1>
    %772 = arith.andi %770, %771 : vector<1x128xi1>
    %773 = vector.broadcast %734 : f32 to vector<1x128xf32>
    %774 = arith.select %772, %773, %689 : vector<1x128xi1>, vector<1x128xf32>
    %775 = vector.shape_cast %764 : vector<1x1xf32> to vector<1x1xf32>
    %776 = vector.broadcast %775 : vector<1x1xf32> to vector<1x128xf32>
    %777 = arith.select %772, %776, %692 : vector<1x128xi1>, vector<1x128xf32>
    %778 = vector.shape_cast %765 : vector<1x1xf32> to vector<1x1xf32>
    %779 = vector.broadcast %778 : vector<1x1xf32> to vector<1x128xf32>
    %780 = arith.select %772, %779, %695 : vector<1x128xi1>, vector<1x128xf32>
    %781 = vector.shape_cast %766 : vector<1x1xf32> to vector<1x1xf32>
    %782 = vector.broadcast %781 : vector<1x1xf32> to vector<1x128xf32>
    %783 = arith.select %772, %782, %698 : vector<1x128xi1>, vector<1x128xf32>
    %784 = vector.shape_cast %767 : vector<1x1xf32> to vector<1x1xf32>
    %785 = vector.broadcast %784 : vector<1x1xf32> to vector<1x128xf32>
    %786 = arith.select %772, %785, %701 : vector<1x128xi1>, vector<1x128xf32>
    %787 = arith.extui %757 : i1 to i32
    %788 = arith.sitofp %787 : i32 to f32
    %789 = arith.addf %704, %788 : f32
    %790 = vector.broadcast %764 : vector<1x1xf32> to vector<1x256xf32>
    %791 = arith.maximumf %29, %790 : vector<1x256xf32>
    %792 = vector.broadcast %765 : vector<1x1xf32> to vector<1x256xf32>
    %793 = arith.maximumf %32, %792 : vector<1x256xf32>
    %794 = vector.broadcast %766 : vector<1x1xf32> to vector<1x256xf32>
    %795 = arith.minimumf %33, %794 : vector<1x256xf32>
    %796 = vector.broadcast %767 : vector<1x1xf32> to vector<1x256xf32>
    %797 = arith.minimumf %34, %796 : vector<1x256xf32>
    %798 = arith.subf %795, %791 : vector<1x256xf32>
    %cst_123 = arith.constant 0.000000e+00 : f32
    %799 = vector.broadcast %cst_123 : f32 to vector<1x256xf32>
    %800 = arith.maximumf %798, %799 : vector<1x256xf32>
    %801 = arith.subf %797, %793 : vector<1x256xf32>
    %cst_124 = arith.constant 0.000000e+00 : f32
    %802 = vector.broadcast %cst_124 : f32 to vector<1x256xf32>
    %803 = arith.maximumf %801, %802 : vector<1x256xf32>
    %804 = arith.mulf %800, %803 : vector<1x256xf32>
    %805 = arith.subf %37, %804 : vector<1x256xf32>
    %806 = vector.broadcast %768 : vector<1x1xf32> to vector<1x256xf32>
    %807 = arith.addf %805, %806 : vector<1x256xf32>
    %808 = arith.divf %804, %807 : vector<1x256xf32>
    %cst_125 = arith.constant 4.500000e-01 : f32
    %809 = vector.broadcast %cst_125 : f32 to vector<1x256xf32>
    %810 = arith.cmpf ole, %808, %809 : vector<1x256xf32>
    %cst_126 = arith.constant dense<true> : vector<1x256xi1>
    %811 = arith.xori %810, %cst_126 : vector<1x256xi1>
    %812 = vector.broadcast %757 : i1 to vector<1x256xi1>
    %813 = arith.andi %812, %811 : vector<1x256xi1>
    %cst_127 = arith.constant 1.000000e+00 : f32
    %814 = vector.broadcast %cst_127 : f32 to vector<1x256xf32>
    %815 = arith.select %813, %814, %730 : vector<1x256xi1>, vector<1x256xf32>
    %c9_i32 = arith.constant 9 : i32
    %816 = vector.shape_cast %749 : vector<1x256xf32> to vector<1x1x256xf32>
    %cst_128 = arith.constant dense<0xFF800000> : vector<1xf32>
    %817 = vector.multi_reduction <maximumf>, %816, %cst_128 [1, 2] : vector<1x1x256xf32> to vector<1xf32>
    %818 = vector.shape_cast %817 : vector<1xf32> to vector<1x1x1xf32>
    %819 = vector.extract %818[0, 0, 0] : f32 from vector<1x1x1xf32>
    %820 = arith.cmpf ogt, %819, %cst_16 : f32
    %821 = vector.broadcast %819 : f32 to vector<1x256xf32>
    %822 = arith.cmpf oeq, %749, %821 : vector<1x256xf32>
    %823 = vector.broadcast %cst_17 : f32 to vector<1x256xf32>
    %824 = arith.select %822, %45, %823 : vector<1x256xi1>, vector<1x256xf32>
    %825 = vector.shape_cast %824 : vector<1x256xf32> to vector<1x1x256xf32>
    %cst_129 = arith.constant dense<0x7F800000> : vector<1xf32>
    %826 = vector.multi_reduction <minimumf>, %825, %cst_129 [1, 2] : vector<1x1x256xf32> to vector<1xf32>
    %827 = vector.shape_cast %826 : vector<1xf32> to vector<1x1x1xf32>
    %828 = vector.extract %827[0, 0, 0] : f32 from vector<1x1x1xf32>
    %829 = vector.broadcast %828 : f32 to vector<1x256xf32>
    %830 = arith.cmpf oeq, %45, %829 : vector<1x256xf32>
    %831 = vector.broadcast %820 : i1 to vector<1x256xi1>
    %832 = arith.andi %830, %831 : vector<1x256xi1>
    %833 = vector.broadcast %cst_18 : f32 to vector<1x256xf32>
    %834 = arith.select %832, %833, %749 : vector<1x256xi1>, vector<1x256xf32>
    %cst_130 = arith.constant 0.000000e+00 : f32
    %835 = vector.broadcast %cst_130 : f32 to vector<1x256xf32>
    %836 = arith.select %832, %815, %835 : vector<1x256xi1>, vector<1x256xf32>
    %837 = vector.shape_cast %836 : vector<1x256xf32> to vector<1x1x256xf32>
    %cst_131 = arith.constant dense<0.000000e+00> : vector<1xf32>
    %838 = vector.multi_reduction <add>, %837, %cst_131 [1, 2] : vector<1x1x256xf32> to vector<1xf32>
    %839 = vector.shape_cast %838 : vector<1xf32> to vector<1x1x1xf32>
    %840 = vector.extract %839[0, 0, 0] : f32 from vector<1x1x1xf32>
    %cst_132 = arith.constant 5.000000e-01 : f32
    %841 = arith.cmpf olt, %840, %cst_132 : f32
    %842 = arith.andi %820, %841 : i1
    %cst_133 = arith.constant 0.000000e+00 : f32
    %843 = vector.shape_cast %832 : vector<1x256xi1> to vector<1x256xi1>
    %844 = vector.broadcast %843 : vector<1x256xi1> to vector<5x256xi1>
    %845 = vector.broadcast %cst_133 : f32 to vector<5x256xf32>
    %846 = arith.select %844, %46, %845 : vector<5x256xi1>, vector<5x256xf32>
    %cst_134 = arith.constant dense<0.000000e+00> : vector<5xf32>
    %847 = vector.multi_reduction <add>, %846, %cst_134 [1] : vector<5x256xf32> to vector<5xf32>
    %848 = vector.shape_cast %847 : vector<5xf32> to vector<5x1xf32>
    %849 = vector.extract_strided_slice %848 {offsets = [0, 0], sizes = [1, 1], strides = [1, 1]} : vector<5x1xf32> to vector<1x1xf32>
    %850 = vector.extract_strided_slice %848 {offsets = [1, 0], sizes = [1, 1], strides = [1, 1]} : vector<5x1xf32> to vector<1x1xf32>
    %851 = vector.extract_strided_slice %848 {offsets = [2, 0], sizes = [1, 1], strides = [1, 1]} : vector<5x1xf32> to vector<1x1xf32>
    %852 = vector.extract_strided_slice %848 {offsets = [3, 0], sizes = [1, 1], strides = [1, 1]} : vector<5x1xf32> to vector<1x1xf32>
    %853 = vector.extract_strided_slice %848 {offsets = [4, 0], sizes = [1, 1], strides = [1, 1]} : vector<5x1xf32> to vector<1x1xf32>
    %854 = vector.broadcast %789 : f32 to vector<1x128xf32>
    %855 = arith.cmpf oeq, %48, %854 : vector<1x128xf32>
    %856 = vector.broadcast %842 : i1 to vector<1x128xi1>
    %857 = arith.andi %855, %856 : vector<1x128xi1>
    %858 = vector.broadcast %819 : f32 to vector<1x128xf32>
    %859 = arith.select %857, %858, %774 : vector<1x128xi1>, vector<1x128xf32>
    %860 = vector.shape_cast %849 : vector<1x1xf32> to vector<1x1xf32>
    %861 = vector.broadcast %860 : vector<1x1xf32> to vector<1x128xf32>
    %862 = arith.select %857, %861, %777 : vector<1x128xi1>, vector<1x128xf32>
    %863 = vector.shape_cast %850 : vector<1x1xf32> to vector<1x1xf32>
    %864 = vector.broadcast %863 : vector<1x1xf32> to vector<1x128xf32>
    %865 = arith.select %857, %864, %780 : vector<1x128xi1>, vector<1x128xf32>
    %866 = vector.shape_cast %851 : vector<1x1xf32> to vector<1x1xf32>
    %867 = vector.broadcast %866 : vector<1x1xf32> to vector<1x128xf32>
    %868 = arith.select %857, %867, %783 : vector<1x128xi1>, vector<1x128xf32>
    %869 = vector.shape_cast %852 : vector<1x1xf32> to vector<1x1xf32>
    %870 = vector.broadcast %869 : vector<1x1xf32> to vector<1x128xf32>
    %871 = arith.select %857, %870, %786 : vector<1x128xi1>, vector<1x128xf32>
    %872 = arith.extui %842 : i1 to i32
    %873 = arith.sitofp %872 : i32 to f32
    %874 = arith.addf %789, %873 : f32
    %875 = vector.broadcast %849 : vector<1x1xf32> to vector<1x256xf32>
    %876 = arith.maximumf %29, %875 : vector<1x256xf32>
    %877 = vector.broadcast %850 : vector<1x1xf32> to vector<1x256xf32>
    %878 = arith.maximumf %32, %877 : vector<1x256xf32>
    %879 = vector.broadcast %851 : vector<1x1xf32> to vector<1x256xf32>
    %880 = arith.minimumf %33, %879 : vector<1x256xf32>
    %881 = vector.broadcast %852 : vector<1x1xf32> to vector<1x256xf32>
    %882 = arith.minimumf %34, %881 : vector<1x256xf32>
    %883 = arith.subf %880, %876 : vector<1x256xf32>
    %cst_135 = arith.constant 0.000000e+00 : f32
    %884 = vector.broadcast %cst_135 : f32 to vector<1x256xf32>
    %885 = arith.maximumf %883, %884 : vector<1x256xf32>
    %886 = arith.subf %882, %878 : vector<1x256xf32>
    %cst_136 = arith.constant 0.000000e+00 : f32
    %887 = vector.broadcast %cst_136 : f32 to vector<1x256xf32>
    %888 = arith.maximumf %886, %887 : vector<1x256xf32>
    %889 = arith.mulf %885, %888 : vector<1x256xf32>
    %890 = arith.subf %37, %889 : vector<1x256xf32>
    %891 = vector.broadcast %853 : vector<1x1xf32> to vector<1x256xf32>
    %892 = arith.addf %890, %891 : vector<1x256xf32>
    %893 = arith.divf %889, %892 : vector<1x256xf32>
    %cst_137 = arith.constant 4.500000e-01 : f32
    %894 = vector.broadcast %cst_137 : f32 to vector<1x256xf32>
    %895 = arith.cmpf ole, %893, %894 : vector<1x256xf32>
    %cst_138 = arith.constant dense<true> : vector<1x256xi1>
    %896 = arith.xori %895, %cst_138 : vector<1x256xi1>
    %897 = vector.broadcast %842 : i1 to vector<1x256xi1>
    %898 = arith.andi %897, %896 : vector<1x256xi1>
    %cst_139 = arith.constant 1.000000e+00 : f32
    %899 = vector.broadcast %cst_139 : f32 to vector<1x256xf32>
    %900 = arith.select %898, %899, %815 : vector<1x256xi1>, vector<1x256xf32>
    %cst_140 = arith.constant 0.000000e+00 : f32
    %901 = vector.broadcast %cst_140 : f32 to vector<3x128xf32>
    %902 = tpu.concatenate %859, %862, %865, %868, %871, %901 in 0 : vector<1x128xf32>, vector<1x128xf32>, vector<1x128xf32>, vector<1x128xf32>, vector<1x128xf32>, vector<3x128xf32> -> vector<8x128xf32>
    %c0_141 = arith.constant 0 : index
    %c0_142 = arith.constant 0 : index
    %c0_143 = arith.constant 0 : index
    %903 = vector.load %arg4[%c0_141, %c0_142, %c0_143] : memref<1x8x128xf32, #tpu.memory_space<vmem>>, vector<1x8x128xf32>
    %904 = vector.shape_cast %903 : vector<1x8x128xf32> to vector<8x128xf32>
    %905 = vector.shape_cast %902 : vector<8x128xf32> to vector<1x8x128xf32>
    tpu.vector_store %arg4[%c0_141, %c0_142, %c0_143], %905 {strides = array<i32>} : memref<1x8x128xf32, #tpu.memory_space<vmem>>, vector<1x8x128xf32>,
    return
  }
  func.func @transform_0(%arg0: i32) -> (i32, i32, i32) {
    %c0_i32 = arith.constant 0 : i32
    %c0_i32_0 = arith.constant 0 : i32
    %c0_i32_1 = arith.constant 0 : i32
    return %arg0, %c0_i32, %c0_i32_0 : i32, i32, i32
  }
  func.func @transform_1(%arg0: i32) -> (i32, i32) {
    %c0_i32 = arith.constant 0 : i32
    %c0_i32_0 = arith.constant 0 : i32
    %c0_i32_1 = arith.constant 0 : i32
    return %c0_i32, %c0_i32_0 : i32, i32
  }
  func.func @transform_2(%arg0: i32) -> (i32, i32, i32) {
    %c0_i32 = arith.constant 0 : i32
    %c0_i32_0 = arith.constant 0 : i32
    %c0_i32_1 = arith.constant 0 : i32
    return %arg0, %c0_i32, %c0_i32_0 : i32, i32, i32
  }
  func.func @transform_3(%arg0: i32) -> (i32, i32, i32) {
    %c0_i32 = arith.constant 0 : i32
    %c0_i32_0 = arith.constant 0 : i32
    %c0_i32_1 = arith.constant 0 : i32
    return %arg0, %c0_i32, %c0_i32_0 : i32, i32, i32
  }
}

</mosaic_0001>

<llo_original>
// kernel: detection_output.1
$region0: #{detection_output.1}
  #allocation0 [shape = 'u32[]', space=smem, size = 0x4, offset = 0x4, fixed_abs, tag = 'smem constant byte address 0x4 - core index']
  #allocation1 [shape = 'u32[72,128]{1,0:T(1,128)}', space=vmem, size = 0x9000, scoped, tag = 'internal scratch']
  %s0 = inlined_call_operand.hbm [shape: f32[2,4,256], index: 0, kind: input, shape index: {}]
  %s1 = inlined_call_operand.vmem [shape: f32[4,256], index: 1, kind: input, shape index: {}]
  %s2 = inlined_call_operand.vmem [shape: f32[2,1,256], index: 2, kind: input, shape index: {}]
  %s3 = inlined_call_operand.vmem [shape: f32[2,8,128], index: 3, kind: output, shape index: {}]
  %s4 = sld [smem:[#allocation0]]
  $region49: #{detection_output.1} parent=0
    _
  %s6 = ssub.s32 1, %s4
  %s7 = scalar_select 0, %s6, %s4
  $region1: #{detection_output.1} parent=0
    #allocation2 [shape = 'u8[8192]{0}', space=vmem, size = 0x2000, scoped, tag = 'input window, operand 0']
    #allocation3 [shape = 's32[2]{0}', space=sflag, size = 0x8, scoped, tag = 'scoped memory for detection_output.1']
    %8 = vsyncpa [#allocation3], 0
    %s9 = scalar_lea.sflag [#allocation3], 1
    %10 = vsyncpa %s9, 0
    loop: start=0, step=1, limit=4
    $region2: #{detection_output.1} parent=1 // loop_pre_header
      _
    $region3: #{detection_output.1} parent=1 // loop_header
      %s12 = sphi 0, %s16
      %p13 = scmp.ge.s32.totalorder %s12, 4
      %s22 = sphi 0, %s24
      %s25 = sphi 0, %s22
      %s26 = sphi 0, %s25
      %s42 = sphi 0, %s26
      %s46 = sphi 0, %s46
      %s48 = sphi 0, %s46
      %s49 = sphi 0, %s48
      %s63 = sphi 0, %s49
      %s69 = sphi 0, %s71
      %s72 = sphi 0, %s69
      %s73 = sphi 0, %s72
      %s89 = sphi 0, %s73
      %s95 = sphi 0, %s97
      %s98 = sphi 0, %s95
      %s99 = sphi 0, %s98
      %s115 = sphi 0, %s99
    $region4: #{detection_output.1} parent=1 // loop_header_branch
      %15 = sbr.rel (%p13) target = $region8
    $region5: #{detection_output.1} parent=1 // loop_body
      %s17 = ssub.s32 %s12, 1
      %s18 = ssub.s32 %s12, 2
      %s19 = sadd.s32 %s12, 1
      %s20 = ssub.s32 %s12, %s19
      %p21 = scmp.eq.s32.totalorder %s20, 0
      %s23 = sadd.s32 %s22, 1
      %s24 = scalar_select %p21, %s22, %s23
      %p27 = pneg %p21
      %p28 = scmp.eq.s32.totalorder %s12, 1
      %p29 = por %p27, %p28
      %p30 = scmp.ne.s32.totalorder %s22, %s25
      %p31 = scmp.eq.s32.totalorder %s12, 0
      %p32 = por %p30, %p31
      %p33 = scmp.ne.s32.totalorder %s22, %s25
      %p34 = scmp.eq.s32.totalorder %s17, 1
      %p35 = por %p33, %p34
      %p36 = scmp.ne.s32.totalorder %s25, %s26
      %p37 = scmp.eq.s32.totalorder %s17, 0
      %p38 = por %p36, %p37
      %p39 = scmp.ne.s32.totalorder %s25, %s26
      %p40 = scmp.eq.s32.totalorder %s18, 1
      %p41 = por %p39, %p40
      %p43 = scmp.ne.s32.totalorder %s26, %s42
      %p44 = scmp.eq.s32.totalorder %s18, 0
      %p45 = por %p43, %p44
      %s47 = sadd.s32 %s46, 1
      %p50 = scmp.eq.s32.totalorder %s12, 1
      %p51 = scmp.ne.s32.totalorder %s46, %s48
      %p52 = scmp.eq.s32.totalorder %s12, 0
      %p53 = por %p51, %p52
      %p54 = scmp.ne.s32.totalorder %s46, %s48
      %p55 = scmp.eq.s32.totalorder %s17, 1
      %p56 = por %p54, %p55
      %p57 = scmp.ne.s32.totalorder %s48, %s49
      %p58 = scmp.eq.s32.totalorder %s17, 0
      %p59 = por %p57, %p58
      %p60 = scmp.ne.s32.totalorder %s48, %s49
      %p61 = scmp.eq.s32.totalorder %s18, 1
      %p62 = por %p60, %p61
      %p64 = scmp.ne.s32.totalorder %s49, %s63
      %p65 = scmp.eq.s32.totalorder %s18, 0
      %p66 = por %p64, %p65
      %s67 = ssub.s32 %s12, %s19
      %p68 = scmp.eq.s32.totalorder %s67, 0
      %s70 = sadd.s32 %s69, 1
      %s71 = scalar_select %p68, %s69, %s70
      %p74 = pneg %p68
      %p75 = scmp.eq.s32.totalorder %s12, 1
      %p76 = por %p74, %p75
      %p77 = scmp.ne.s32.totalorder %s69, %s72
      %p78 = scmp.eq.s32.totalorder %s12, 0
      %p79 = por %p77, %p78
      %p80 = scmp.ne.s32.totalorder %s69, %s72
      %p81 = scmp.eq.s32.totalorder %s17, 1
      %p82 = por %p80, %p81
      %p83 = scmp.ne.s32.totalorder %s72, %s73
      %p84 = scmp.eq.s32.totalorder %s17, 0
      %p85 = por %p83, %p84
      %p86 = scmp.ne.s32.totalorder %s72, %s73
      %p87 = scmp.eq.s32.totalorder %s18, 1
      %p88 = por %p86, %p87
      %p90 = scmp.ne.s32.totalorder %s73, %s89
      %p91 = scmp.eq.s32.totalorder %s18, 0
      %p92 = por %p90, %p91
      %s93 = ssub.s32 %s12, %s19
      %p94 = scmp.eq.s32.totalorder %s93, 0
      %s96 = sadd.s32 %s95, 1
      %s97 = scalar_select %p94, %s95, %s96
      %p100 = pneg %p94
      %p101 = scmp.eq.s32.totalorder %s12, 1
      %p102 = por %p100, %p101
      %p103 = scmp.ne.s32.totalorder %s95, %s98
      %p104 = scmp.eq.s32.totalorder %s12, 0
      %p105 = por %p103, %p104
      %p106 = scmp.ne.s32.totalorder %s95, %s98
      %p107 = scmp.eq.s32.totalorder %s17, 1
      %p108 = por %p106, %p107
      %p109 = scmp.ne.s32.totalorder %s98, %s99
      %p110 = scmp.eq.s32.totalorder %s17, 0
      %p111 = por %p109, %p110
      %p112 = scmp.ne.s32.totalorder %s98, %s99
      %p113 = scmp.eq.s32.totalorder %s18, 1
      %p114 = por %p112, %p113
      %p116 = scmp.ne.s32.totalorder %s99, %s115
      %p117 = scmp.eq.s32.totalorder %s18, 0
      %p118 = por %p116, %p117
      %p119 = scmp.le.s32.totalorder 1, %s12
      %p120 = scmp.lt.s32.totalorder %s12, 3
      %p121 = pnand %p119, %p120
      %p122 = pneg %p121
      // Predicated region
      $region9: #{detection_output.1} parent=5 // pred_check
        _
      $region10: #{detection_output.1} parent=5 // pred_check_branch
        %124 = sbr.rel (%p121) target = $region12
      $region11: #{detection_output.1} parent=5 // pred_region
        %s125 = ssub.s32 %s12, 1
        // Predicated region
        $region13: #{detection_output.1} parent=11 // pred_check
          %p126 = pneg %p59
        $region14: #{detection_output.1} parent=11 // pred_check_branch
          %128 = sbr.rel (%p126) target = $region16
        $region15: #{detection_output.1} parent=11 // pred_region
          _
        $region16: #{detection_output.1} parent=11 // pred_fallthru
          _
      $region12: #{detection_output.1} parent=5 // pred_fallthru
        _
      %p129 = scmp.lt.s32.totalorder %s12, 2
      // Predicated region
      $region17: #{detection_output.1} parent=5 // pred_check
        %p130 = pneg %p129
      $region18: #{detection_output.1} parent=5 // pred_check_branch
        %132 = sbr.rel (%p130) target = $region20
      $region19: #{detection_output.1} parent=5 // pred_region
        // Predicated region
        $region21: #{detection_output.1} parent=19 // pred_check
          %p133 = pneg %p32
        $region22: #{detection_output.1} parent=19 // pred_check_branch
          %135 = sbr.rel (%p133) target = $region24
        $region23: #{detection_output.1} parent=19 // pred_region
          %s136 = sand.u32 %s22, 1
          %s137 = scalar_lea.sflag [#allocation3], %s136
          %s138 = sand.u32 %s22, 1
          %s139 = smul.addr %s138, 8
          %s140 = scalar_lea.vmem [#allocation2], %s139
          %142 = vsyncadd %s137, 0
          %s143 = smul.addr %s12, 2
          %s144 = smul.addr %s143, 4
          %s145 = scalar_lea.hbm %s0, %s144
          %s147 = sshll.u32 %s145, 4
          %s148 = int_to_ptr.hbm [resolvable:$true] %s147
          %s149 = sshll.u32 %s140, 4
          %s150 = int_to_ptr.vmem [resolvable:$true] %s149
          %152 = dma.hbm_to_vmem [thread:$0]  %s148, 128, %s150, %s137
        $region24: #{detection_output.1} parent=19 // pred_fallthru
          _
        // Predicated region
        $region25: #{detection_output.1} parent=19 // pred_check
          %p153 = pneg %p79
        $region26: #{detection_output.1} parent=19 // pred_check_branch
          %155 = sbr.rel (%p153) target = $region28
        $region27: #{detection_output.1} parent=19 // pred_region
          %p156 = scmp.lt.s32.totalorder %s12, 1
          %s157 = scalar_select %p156, %s12, 1
          %s158 = smul.addr %s157, 2
          %s159 = scalar_lea.vmem %s2, %s158
        $region28: #{detection_output.1} parent=19 // pred_fallthru
          _
      $region20: #{detection_output.1} parent=5 // pred_fallthru
        _
      %p160 = scmp.le.s32.totalorder 1, %s12
      %p161 = scmp.lt.s32.totalorder %s12, 3
      %p162 = pnand %p160, %p161
      %p163 = pneg %p162
      // Predicated region
      $region29: #{detection_output.1} parent=5 // pred_check
        _
      $region30: #{detection_output.1} parent=5 // pred_check_branch
        %165 = sbr.rel (%p162) target = $region32
      $region31: #{detection_output.1} parent=5 // pred_region
        %s166 = ssub.s32 %s12, 1
        %s167 = sand.u32 %s25, 1
        %s168 = scalar_lea.sflag [#allocation3], %s167
        %s169 = sand.u32 %s25, 1
        %s170 = smul.addr %s169, 8
        %s171 = scalar_lea.vmem [#allocation2], %s170
        // Predicated region
        $region33: #{detection_output.1} parent=31 // pred_check
          %p172 = pneg %p38
        $region34: #{detection_output.1} parent=31 // pred_check_branch
          %174 = sbr.rel (%p172) target = $region36
        $region35: #{detection_output.1} parent=31 // pred_region
          %176 = dma.done %s168, 128
        $region36: #{detection_output.1} parent=31 // pred_fallthru
          _
        %s177 = sand.u32 %s25, 1
        %s178 = scalar_lea.sflag [#allocation3], %s177
        %s179 = sand.u32 %s25, 1
        %s180 = smul.addr %s179, 8
        %s181 = scalar_lea.vmem [#allocation2], %s180
        %p182 = pneg %p38
        %p183 = pneg %p35
        %p184 = pneg %p59
        %p185 = pneg %p56
        %p186 = scmp.lt.s32.totalorder %s17, 1
        %s187 = scalar_select %p186, %s17, 1
        %s188 = smul.addr %s187, 2
        %s189 = scalar_lea.vmem %s2, %s188
        %p190 = pneg %p85
        %p191 = pneg %p82
        %p192 = pneg %p111
        %p193 = pneg %p108
        %p194 = scmp.lt.s32.totalorder %s17, 1
        %s195 = scalar_select %p194, %s17, 1
        %s196 = smul.addr %s195, 8
        %s197 = scalar_lea.vmem %s3, %s196
        %p198 = scmp.lt.s32.totalorder %s17, 1
        %s199 = scalar_select %p198, %s17, 1
        %s200 = smul.addr %s199, 2
        %s201 = scalar_lea.vmem %s2, %s200
        %p202 = scmp.lt.s32.totalorder %s17, 1
        %s203 = scalar_select %p202, %s17, 1
        %s204 = smul.addr %s203, 8
        %s205 = scalar_lea.vmem %s3, %s204
        %v206 = vld [vmem:[%s171] sm:$0xff]
        %v207 = vld [vmem:[%s1] sm:$0xff]
        %v208 = vmul.f32 %v206, 0.1
        %v210 = vrot.slane %v207, 6
        %v211 = vrot.slane %v210, 4
        %v213 = vmul.f32 %v208, %v211
        %v214 = vadd.f32 %v207, %v213
        %v215 = vmul.f32 %v206, 0.2
        %v216 = vmul.f32 %v215, 1.442695
        %v217 = vpow.pop %v216
        %v218 = vmul.f32 %v207, %v217
        %v219 = vmul.f32 %v218, 0.5
        %v221 = vrot.slane %v219, 6
        %v222 = vrot.slane %v221, 4
        %v224 = vsub.f32 %v214, %v222
        %v226 = vrot.slane %v224, 6
        %v228 = vadd.f32 %v218, %v226
        %v229 = vsub.f32 %v228, %v226
        %v231 = vrot.slane %v229, 5
        %v232 = vrot.slane %v231, 4
        %v234 = vmul.f32 %v229, %v232
        %v235 = vld [vmem:[%s201] sm:$0x3]
        %vm236 = vcmp.gt.f32.partialorder %v235, 0.5
        %v237 = vsel %vm236, %v235, -1e+30
        %v238 = vlaneseq
        %v239 = vand.u32 %v238, 127
        %v240 = vadd.s32 %v239, 128
        %v241 = vcvt.s32.f32 %v239
        %v242 = vcvt.s32.f32 %v240
        %v243 = vperm.slane %v224, 0
        %v244 = vperm.slane %v224, 4
        %v247 = vperm.slane %v224, 1
        %v248 = vperm.slane %v224, 5
        %v252 = vperm.slane %v228, 2
        %v253 = vperm.slane %v228, 6
        %v256 = vperm.slane %v228, 3
        %v257 = vperm.slane %v228, 7
        %v261 = vperm.slane %v234, 2
        %v262 = vperm.slane %v234, 6
        %vm265 = vcmask 1040384
        %v266 = vsel %vm265, %v243, %v247
        %v267 = vsel %vm265, %v244, %v248
        %vm268 = vcmask 1041408
        %v269 = vsel %vm268, %v266, %v252
        %v270 = vsel %vm268, %v267, %v253
        %vm271 = vcmask 1042432
        %v272 = vsel %vm271, %v269, %v256
        %v273 = vsel %vm271, %v270, %v257
        %vm274 = vcmask 1043456
        %v275 = vsel %vm274, %v272, %v261
        %v276 = vsel %vm274, %v273, %v262
        %v278 = vperm.slane %v237, 0
        %v279 = vperm.slane %v237, 1
        %v282 = vsel %vm265, %v278, -inf
        %v283 = vsel %vm265, %v279, -inf
        %v284 = vmax.f32 %v282, %v283
        %285 = vmax.xlane.f32.xlu0 %v284
        %v286 = vpop.xlane.xlu0 %285
        %v287 = vrot.slane %v286, 4
        %v288 = vmax.f32 %v286, %v287
        %v289 = vrot.slane %v288, 2
        %v290 = vmax.f32 %v288, %v289
        %v291 = vrot.slane %v290, 1
        %v292 = vmax.f32 %v290, %v291
        %s293 = vtos %v292
        %p294 = scmp.gt.f32.partialorder %s293, -5e+29
        %v295 = vstv %s293
        %vm296 = vcmp.eq.f32.partialorder %v237, %v295
        %v299 = vrot.slane %v242, 7
        %v300 = vsel %vm265, %v241, %v299
        %v302 = vsel %vm296, %v300, 256.0
        %v304 = vperm.slane %v302, 0
        %v305 = vperm.slane %v302, 1
        %v308 = vsel %vm265, %v304, inf
        %v309 = vsel %vm265, %v305, inf
        %v310 = vmin.f32 %v308, %v309
        %311 = vmin.xlane.f32.xlu0 %v310
        %v312 = vpop.xlane.xlu0 %311
        %v313 = vrot.slane %v312, 4
        %v314 = vmin.f32 %v312, %v313
        %v315 = vrot.slane %v314, 2
        %v316 = vmin.f32 %v314, %v315
        %v317 = vrot.slane %v316, 1
        %v318 = vmin.f32 %v316, %v317
        %s319 = vtos %v318
        %v320 = vstv %s319
        %vm321 = vcmp.eq.f32.partialorder %v241, %v320
        %vm322 = vcmp.eq.f32.partialorder %v242, %v320
        %s323 = scalar_select %p294, 1, 0
        %v324 = vstv %s323
        %vm325 = vcmp.eq.s32.totalorder %v324, 1
        %vm326 = vmand %vm321, %vm325
        %vm327 = vmand %vm322, %vm325
        %v328 = vsel %vm326, -1e+30, %v278
        %v329 = vsel %vm327, -1e+30, %v279
        %330 = vadd.xlane.f32.xlu0 0.0
        %v331 = vpop.xlane.xlu0 %330
        %v332 = vrot.slane %v331, 4
        %v333 = vadd.f32 %v331, %v332
        %v334 = vrot.slane %v333, 2
        %v335 = vadd.f32 %v333, %v334
        %v336 = vrot.slane %v335, 1
        %v337 = vadd.f32 %v335, %v336
        %s338 = vtos %v337
        %p339 = scmp.lt.f32.partialorder %s338, 0.5
        %p340 = pnand %p294, %p339
        %p341 = pneg %p340
        %v342 = vsel %vm326, 1, 0
        %v343 = vsel %vm327, 1, 0
        %vm344 = vcmp.eq.s32.totalorder %v342, 1
        %vm345 = vcmp.eq.s32.totalorder %v343, 1
        %v346 = vsel %vm344, %v275, 0.0
        %v347 = vsel %vm345, %v276, 0.0
        %vm348 = vcmask 1044480
        %v349 = vsel %vm348, %v346, 0.0
        %v350 = vsel %vm348, %v347, 0.0
        %v351 = vadd.f32 %v349, %v350
        %352 = vadd.xlane.f32.xlu0 %v351
        %v353 = vpop.xlane.xlu0 %352
        %vm354 = vcmp.eq.f32.partialorder %v241, 0.0
        %s355 = scalar_select %p341, 1, 0
        %v356 = vstv %s355
        %vm357 = vcmp.eq.s32.totalorder %v356, 1
        %vm358 = vmand %vm354, %vm357
        %v359 = vsel %vm358, %v295, 0.0
        %v360 = vsel %vm358, %v353, 0.0
        %s361 = scvt.s32.f32 %s355
        %s362 = sadd.f32 %s361, 0.0
        %v365 = vunpack.c.l.s4 839922192
        %v366 = vunpack.c.0.s8 %v365
        %v367 = vperm.slane %v353, %v366
        %v369 = vmax.f32 %v224, %v367
        %v370 = vmin.f32 %v228, %v367
        %v372 = vrot.slane %v369, 6
        %v374 = vsub.f32 %v370, %v372
        %v375 = vmax.f32 %v374, 0.0
        %v377 = vrot.slane %v375, 5
        %v378 = vrot.slane %v377, 4
        %v380 = vmul.f32 %v375, %v378
        %v381 = vsub.f32 %v234, %v380
        %v383 = vunpack.c.l.s4 1985246804
        %v384 = vunpack.c.0.s8 %v383
        %v385 = vperm.slane %v353, %v384
        %v386 = vrot.slane %v385, 6
        %v388 = vadd.f32 %v381, %v386
        %v389 = vrcp.pop %v388
        %v390 = vmul.f32 %v388, %v389
        %v391 = vsub.f32 1.0, %v390
        %v392 = vmul.f32 %v389, %v391
        %v393 = vadd.f32 %v389, %v392
        %vm394 = vweird.f32 %v388
        %vm395 = vweird.f32 %v389
        %vm396 = vmor %vm394, %vm395
        %v397 = vsel %vm396, %v389, %v393
        %v398 = vand.u32 2147483647, %v388
        %vm399 = vcmp.eq.f32.partialorder %v398, 8.507059e+37
        %v400 = vand.u32 %v388, 2147483648
        %v401 = vor.u32 1.1754944e-38, %v400
        %v402 = vsel %vm399, %v401, %v397
        %v403 = vmul.f32 %v380, %v402
        %vm404 = vcmp.le.f32.partialorder %v403, 0.45
        %vm405 = vmxor %vm404, 1
        %vm406 = vmand %vm357, %vm405
        %v407 = vsel %vm406, 1.0, 0.0
        %v408 = vsel %vm265, %v328, -inf
        %v409 = vsel %vm265, %v329, -inf
        %v410 = vmax.f32 %v408, %v409
        %411 = vmax.xlane.f32.xlu0 %v410
        %v412 = vpop.xlane.xlu0 %411
        %v413 = vrot.slane %v412, 4
        %v414 = vmax.f32 %v412, %v413
        %v415 = vrot.slane %v414, 2
        %v416 = vmax.f32 %v414, %v415
        %v417 = vrot.slane %v416, 1
        %v418 = vmax.f32 %v416, %v417
        %s419 = vtos %v418
        %p420 = scmp.gt.f32.partialorder %s419, -5e+29
        %v421 = vstv %s419
        %vm422 = vcmp.eq.f32.partialorder %v328, %v421
        %vm423 = vcmp.eq.f32.partialorder %v329, %v421
        %v424 = vsel %vm422, %v241, 256.0
        %v425 = vsel %vm423, %v242, 256.0
        %v426 = vsel %vm265, %v424, inf
        %v427 = vsel %vm265, %v425, inf
        %v428 = vmin.f32 %v426, %v427
        %429 = vmin.xlane.f32.xlu0 %v428
        %v430 = vpop.xlane.xlu0 %429
        %v431 = vrot.slane %v430, 4
        %v432 = vmin.f32 %v430, %v431
        %v433 = vrot.slane %v432, 2
        %v434 = vmin.f32 %v432, %v433
        %v435 = vrot.slane %v434, 1
        %v436 = vmin.f32 %v434, %v435
        %s437 = vtos %v436
        %v438 = vstv %s437
        %vm439 = vcmp.eq.f32.partialorder %v241, %v438
        %vm440 = vcmp.eq.f32.partialorder %v242, %v438
        %s441 = scalar_select %p420, 1, 0
        %v442 = vstv %s441
        %vm443 = vcmp.eq.s32.totalorder %v442, 1
        %vm444 = vmand %vm439, %vm443
        %vm445 = vmand %vm440, %vm443
        %v446 = vsel %vm444, -1e+30, %v328
        %v447 = vsel %vm445, -1e+30, %v329
        %v449 = vperm.slane %v407, 2
        %v450 = vperm.slane %v407, 6
        %v453 = vsel %vm444, %v449, 0.0
        %v454 = vsel %vm445, %v450, 0.0
        %v455 = vsel %vm265, %v453, 0.0
        %v456 = vsel %vm265, %v454, 0.0
        %v457 = vadd.f32 %v455, %v456
        %458 = vadd.xlane.f32.xlu0 %v457
        %v459 = vpop.xlane.xlu0 %458
        %v460 = vrot.slane %v459, 4
        %v461 = vadd.f32 %v459, %v460
        %v462 = vrot.slane %v461, 2
        %v463 = vadd.f32 %v461, %v462
        %v464 = vrot.slane %v463, 1
        %v465 = vadd.f32 %v463, %v464
        %s466 = vtos %v465
        %p467 = scmp.lt.f32.partialorder %s466, 0.5
        %p468 = pnand %p420, %p467
        %p469 = pneg %p468
        %v470 = vsel %vm444, 1, 0
        %v471 = vsel %vm445, 1, 0
        %vm472 = vcmp.eq.s32.totalorder %v470, 1
        %vm473 = vcmp.eq.s32.totalorder %v471, 1
        %v474 = vsel %vm472, %v275, 0.0
        %v475 = vsel %vm473, %v276, 0.0
        %v476 = vsel %vm348, %v474, 0.0
        %v477 = vsel %vm348, %v475, 0.0
        %v478 = vadd.f32 %v476, %v477
        %479 = vadd.xlane.f32.xlu0 %v478
        %v480 = vpop.xlane.xlu0 %479
        %v481 = vstv %s362
        %vm482 = vcmp.eq.f32.partialorder %v241, %v481
        %s483 = scalar_select %p469, 1, 0
        %v484 = vstv %s483
        %vm485 = vcmp.eq.s32.totalorder %v484, 1
        %vm486 = vmand %vm482, %vm485
        %v487 = vsel %vm486, %v421, %v359
        %v488 = vsel %vm486, %v480, %v360
        %s489 = scvt.s32.f32 %s483
        %s490 = sadd.f32 %s362, %s489
        %v493 = vunpack.c.l.s4 839922192
        %v494 = vunpack.c.0.s8 %v493
        %v495 = vperm.slane %v480, %v494
        %v497 = vmax.f32 %v224, %v495
        %v498 = vmin.f32 %v228, %v495
        %v500 = vrot.slane %v497, 6
        %v502 = vsub.f32 %v498, %v500
        %v503 = vmax.f32 %v502, 0.0
        %v505 = vrot.slane %v503, 5
        %v506 = vrot.slane %v505, 4
        %v508 = vmul.f32 %v503, %v506
        %v509 = vsub.f32 %v234, %v508
        %v511 = vunpack.c.l.s4 1985246804
        %v512 = vunpack.c.0.s8 %v511
        %v513 = vperm.slane %v480, %v512
        %v514 = vrot.slane %v513, 6
        %v516 = vadd.f32 %v509, %v514
        %v517 = vrcp.pop %v516
        %v518 = vmul.f32 %v516, %v517
        %v519 = vsub.f32 1.0, %v518
        %v520 = vmul.f32 %v517, %v519
        %v521 = vadd.f32 %v517, %v520
        %vm522 = vweird.f32 %v516
        %vm523 = vweird.f32 %v517
        %vm524 = vmor %vm522, %vm523
        %v525 = vsel %vm524, %v517, %v521
        %v526 = vand.u32 2147483647, %v516
        %vm527 = vcmp.eq.f32.partialorder %v526, 8.507059e+37
        %v528 = vand.u32 %v516, 2147483648
        %v529 = vor.u32 1.1754944e-38, %v528
        %v530 = vsel %vm527, %v529, %v525
        %v531 = vmul.f32 %v508, %v530
        %vm532 = vcmp.le.f32.partialorder %v531, 0.45
        %vm533 = vmxor %vm532, 1
        %vm534 = vmand %vm485, %vm533
        %v535 = vsel %vm534, 1.0, %v407
        %v536 = vsel %vm265, %v446, -inf
        %v537 = vsel %vm265, %v447, -inf
        %v538 = vmax.f32 %v536, %v537
        %539 = vmax.xlane.f32.xlu0 %v538
        %v540 = vpop.xlane.xlu0 %539
        %v541 = vrot.slane %v540, 4
        %v542 = vmax.f32 %v540, %v541
        %v543 = vrot.slane %v542, 2
        %v544 = vmax.f32 %v542, %v543
        %v545 = vrot.slane %v544, 1
        %v546 = vmax.f32 %v544, %v545
        %s547 = vtos %v546
        %p548 = scmp.gt.f32.partialorder %s547, -5e+29
        %v549 = vstv %s547
        %vm550 = vcmp.eq.f32.partialorder %v446, %v549
        %vm551 = vcmp.eq.f32.partialorder %v447, %v549
        %v552 = vsel %vm550, %v241, 256.0
        %v553 = vsel %vm551, %v242, 256.0
        %v554 = vsel %vm265, %v552, inf
        %v555 = vsel %vm265, %v553, inf
        %v556 = vmin.f32 %v554, %v555
        %557 = vmin.xlane.f32.xlu0 %v556
        %v558 = vpop.xlane.xlu0 %557
        %v559 = vrot.slane %v558, 4
        %v560 = vmin.f32 %v558, %v559
        %v561 = vrot.slane %v560, 2
        %v562 = vmin.f32 %v560, %v561
        %v563 = vrot.slane %v562, 1
        %v564 = vmin.f32 %v562, %v563
        %s565 = vtos %v564
        %v566 = vstv %s565
        %vm567 = vcmp.eq.f32.partialorder %v241, %v566
        %vm568 = vcmp.eq.f32.partialorder %v242, %v566
        %s569 = scalar_select %p548, 1, 0
        %v570 = vstv %s569
        %vm571 = vcmp.eq.s32.totalorder %v570, 1
        %vm572 = vmand %vm567, %vm571
        %vm573 = vmand %vm568, %vm571
        %v574 = vsel %vm572, -1e+30, %v446
        %v575 = vsel %vm573, -1e+30, %v447
        %v577 = vperm.slane %v535, 2
        %v578 = vperm.slane %v535, 6
        %v581 = vsel %vm572, %v577, 0.0
        %v582 = vsel %vm573, %v578, 0.0
        %v583 = vsel %vm265, %v581, 0.0
        %v584 = vsel %vm265, %v582, 0.0
        %v585 = vadd.f32 %v583, %v584
        %586 = vadd.xlane.f32.xlu0 %v585
        %v587 = vpop.xlane.xlu0 %586
        %v588 = vrot.slane %v587, 4
        %v589 = vadd.f32 %v587, %v588
        %v590 = vrot.slane %v589, 2
        %v591 = vadd.f32 %v589, %v590
        %v592 = vrot.slane %v591, 1
        %v593 = vadd.f32 %v591, %v592
        %s594 = vtos %v593
        %p595 = scmp.lt.f32.partialorder %s594, 0.5
        %p596 = pnand %p548, %p595
        %p597 = pneg %p596
        %v598 = vsel %vm572, 1, 0
        %v599 = vsel %vm573, 1, 0
        %vm600 = vcmp.eq.s32.totalorder %v598, 1
        %vm601 = vcmp.eq.s32.totalorder %v599, 1
        %v602 = vsel %vm600, %v275, 0.0
        %v603 = vsel %vm601, %v276, 0.0
        %v604 = vsel %vm348, %v602, 0.0
        %v605 = vsel %vm348, %v603, 0.0
        %v606 = vadd.f32 %v604, %v605
        %607 = vadd.xlane.f32.xlu0 %v606
        %v608 = vpop.xlane.xlu0 %607
        %v609 = vstv %s490
        %vm610 = vcmp.eq.f32.partialorder %v241, %v609
        %s611 = scalar_select %p597, 1, 0
        %v612 = vstv %s611
        %vm613 = vcmp.eq.s32.totalorder %v612, 1
        %vm614 = vmand %vm610, %vm613
        %v615 = vsel %vm614, %v549, %v487
        %v616 = vsel %vm614, %v608, %v488
        %s617 = scvt.s32.f32 %s611
        %s618 = sadd.f32 %s490, %s617
        %v621 = vunpack.c.l.s4 839922192
        %v622 = vunpack.c.0.s8 %v621
        %v623 = vperm.slane %v608, %v622
        %v625 = vmax.f32 %v224, %v623
        %v626 = vmin.f32 %v228, %v623
        %v628 = vrot.slane %v625, 6
        %v630 = vsub.f32 %v626, %v628
        %v631 = vmax.f32 %v630, 0.0
        %v633 = vrot.slane %v631, 5
        %v634 = vrot.slane %v633, 4
        %v636 = vmul.f32 %v631, %v634
        %v637 = vsub.f32 %v234, %v636
        %v639 = vunpack.c.l.s4 1985246804
        %v640 = vunpack.c.0.s8 %v639
        %v641 = vperm.slane %v608, %v640
        %v642 = vrot.slane %v641, 6
        %v644 = vadd.f32 %v637, %v642
        %v645 = vrcp.pop %v644
        %v646 = vmul.f32 %v644, %v645
        %v647 = vsub.f32 1.0, %v646
        %v648 = vmul.f32 %v645, %v647
        %v649 = vadd.f32 %v645, %v648
        %vm650 = vweird.f32 %v644
        %vm651 = vweird.f32 %v645
        %vm652 = vmor %vm650, %vm651
        %v653 = vsel %vm652, %v645, %v649
        %v654 = vand.u32 2147483647, %v644
        %vm655 = vcmp.eq.f32.partialorder %v654, 8.507059e+37
        %v656 = vand.u32 %v644, 2147483648
        %v657 = vor.u32 1.1754944e-38, %v656
        %v658 = vsel %vm655, %v657, %v653
        %v659 = vmul.f32 %v636, %v658
        %vm660 = vcmp.le.f32.partialorder %v659, 0.45
        %vm661 = vmxor %vm660, 1
        %vm662 = vmand %vm613, %vm661
        %v663 = vsel %vm662, 1.0, %v535
        %v664 = vsel %vm265, %v574, -inf
        %v665 = vsel %vm265, %v575, -inf
        %v666 = vmax.f32 %v664, %v665
        %667 = vmax.xlane.f32.xlu0 %v666
        %v668 = vpop.xlane.xlu0 %667
        %v669 = vrot.slane %v668, 4
        %v670 = vmax.f32 %v668, %v669
        %v671 = vrot.slane %v670, 2
        %v672 = vmax.f32 %v670, %v671
        %v673 = vrot.slane %v672, 1
        %v674 = vmax.f32 %v672, %v673
        %s675 = vtos %v674
        %p676 = scmp.gt.f32.partialorder %s675, -5e+29
        %v677 = vstv %s675
        %vm678 = vcmp.eq.f32.partialorder %v574, %v677
        %vm679 = vcmp.eq.f32.partialorder %v575, %v677
        %v680 = vsel %vm678, %v241, 256.0
        %v681 = vsel %vm679, %v242, 256.0
        %v682 = vsel %vm265, %v680, inf
        %v683 = vsel %vm265, %v681, inf
        %v684 = vmin.f32 %v682, %v683
        %685 = vmin.xlane.f32.xlu0 %v684
        %v686 = vpop.xlane.xlu0 %685
        %v687 = vrot.slane %v686, 4
        %v688 = vmin.f32 %v686, %v687
        %v689 = vrot.slane %v688, 2
        %v690 = vmin.f32 %v688, %v689
        %v691 = vrot.slane %v690, 1
        %v692 = vmin.f32 %v690, %v691
        %s693 = vtos %v692
        %v694 = vstv %s693
        %vm695 = vcmp.eq.f32.partialorder %v241, %v694
        %vm696 = vcmp.eq.f32.partialorder %v242, %v694
        %s697 = scalar_select %p676, 1, 0
        %v698 = vstv %s697
        %vm699 = vcmp.eq.s32.totalorder %v698, 1
        %vm700 = vmand %vm695, %vm699
        %vm701 = vmand %vm696, %vm699
        %v702 = vsel %vm700, -1e+30, %v574
        %v703 = vsel %vm701, -1e+30, %v575
        %v705 = vperm.slane %v663, 2
        %v706 = vperm.slane %v663, 6
        %v709 = vsel %vm700, %v705, 0.0
        %v710 = vsel %vm701, %v706, 0.0
        %v711 = vsel %vm265, %v709, 0.0
        %v712 = vsel %vm265, %v710, 0.0
        %v713 = vadd.f32 %v711, %v712
        %714 = vadd.xlane.f32.xlu0 %v713
        %v715 = vpop.xlane.xlu0 %714
        %v716 = vrot.slane %v715, 4
        %v717 = vadd.f32 %v715, %v716
        %v718 = vrot.slane %v717, 2
        %v719 = vadd.f32 %v717, %v718
        %v720 = vrot.slane %v719, 1
        %v721 = vadd.f32 %v719, %v720
        %s722 = vtos %v721
        %p723 = scmp.lt.f32.partialorder %s722, 0.5
        %p724 = pnand %p676, %p723
        %p725 = pneg %p724
        %v726 = vsel %vm700, 1, 0
        %v727 = vsel %vm701, 1, 0
        %vm728 = vcmp.eq.s32.totalorder %v726, 1
        %vm729 = vcmp.eq.s32.totalorder %v727, 1
        %v730 = vsel %vm728, %v275, 0.0
        %v731 = vsel %vm729, %v276, 0.0
        %v732 = vsel %vm348, %v730, 0.0
        %v733 = vsel %vm348, %v731, 0.0
        %v734 = vadd.f32 %v732, %v733
        %735 = vadd.xlane.f32.xlu0 %v734
        %v736 = vpop.xlane.xlu0 %735
        %v737 = vstv %s618
        %vm738 = vcmp.eq.f32.partialorder %v241, %v737
        %s739 = scalar_select %p725, 1, 0
        %v740 = vstv %s739
        %vm741 = vcmp.eq.s32.totalorder %v740, 1
        %vm742 = vmand %vm738, %vm741
        %v743 = vsel %vm742, %v677, %v615
        %v744 = vsel %vm742, %v736, %v616
        %s745 = scvt.s32.f32 %s739
        %s746 = sadd.f32 %s618, %s745
        %v749 = vunpack.c.l.s4 839922192
        %v750 = vunpack.c.0.s8 %v749
        %v751 = vperm.slane %v736, %v750
        %v753 = vmax.f32 %v224, %v751
        %v754 = vmin.f32 %v228, %v751
        %v756 = vrot.slane %v753, 6
        %v758 = vsub.f32 %v754, %v756
        %v759 = vmax.f32 %v758, 0.0
        %v761 = vrot.slane %v759, 5
        %v762 = vrot.slane %v761, 4
        %v764 = vmul.f32 %v759, %v762
        %v765 = vsub.f32 %v234, %v764
        %v767 = vunpack.c.l.s4 1985246804
        %v768 = vunpack.c.0.s8 %v767
        %v769 = vperm.slane %v736, %v768
        %v770 = vrot.slane %v769, 6
        %v772 = vadd.f32 %v765, %v770
        %v773 = vrcp.pop %v772
        %v774 = vmul.f32 %v772, %v773
        %v775 = vsub.f32 1.0, %v774
        %v776 = vmul.f32 %v773, %v775
        %v777 = vadd.f32 %v773, %v776
        %vm778 = vweird.f32 %v772
        %vm779 = vweird.f32 %v773
        %vm780 = vmor %vm778, %vm779
        %v781 = vsel %vm780, %v773, %v777
        %v782 = vand.u32 2147483647, %v772
        %vm783 = vcmp.eq.f32.partialorder %v782, 8.507059e+37
        %v784 = vand.u32 %v772, 2147483648
        %v785 = vor.u32 1.1754944e-38, %v784
        %v786 = vsel %vm783, %v785, %v781
        %v787 = vmul.f32 %v764, %v786
        %vm788 = vcmp.le.f32.partialorder %v787, 0.45
        %vm789 = vmxor %vm788, 1
        %vm790 = vmand %vm741, %vm789
        %v791 = vsel %vm790, 1.0, %v663
        %v792 = vsel %vm265, %v702, -inf
        %v793 = vsel %vm265, %v703, -inf
        %v794 = vmax.f32 %v792, %v793
        %795 = vmax.xlane.f32.xlu0 %v794
        %v796 = vpop.xlane.xlu0 %795
        %v797 = vrot.slane %v796, 4
        %v798 = vmax.f32 %v796, %v797
        %v799 = vrot.slane %v798, 2
        %v800 = vmax.f32 %v798, %v799
        %v801 = vrot.slane %v800, 1
        %v802 = vmax.f32 %v800, %v801
        %s803 = vtos %v802
        %p804 = scmp.gt.f32.partialorder %s803, -5e+29
        %v805 = vstv %s803
        %vm806 = vcmp.eq.f32.partialorder %v702, %v805
        %vm807 = vcmp.eq.f32.partialorder %v703, %v805
        %v808 = vsel %vm806, %v241, 256.0
        %v809 = vsel %vm807, %v242, 256.0
        %v810 = vsel %vm265, %v808, inf
        %v811 = vsel %vm265, %v809, inf
        %v812 = vmin.f32 %v810, %v811
        %813 = vmin.xlane.f32.xlu0 %v812
        %v814 = vpop.xlane.xlu0 %813
        %v815 = vrot.slane %v814, 4
        %v816 = vmin.f32 %v814, %v815
        %v817 = vrot.slane %v816, 2
        %v818 = vmin.f32 %v816, %v817
        %v819 = vrot.slane %v818, 1
        %v820 = vmin.f32 %v818, %v819
        %s821 = vtos %v820
        %v822 = vstv %s821
        %vm823 = vcmp.eq.f32.partialorder %v241, %v822
        %vm824 = vcmp.eq.f32.partialorder %v242, %v822
        %s825 = scalar_select %p804, 1, 0
        %v826 = vstv %s825
        %vm827 = vcmp.eq.s32.totalorder %v826, 1
        %vm828 = vmand %vm823, %vm827
        %vm829 = vmand %vm824, %vm827
        %v830 = vsel %vm828, -1e+30, %v702
        %v831 = vsel %vm829, -1e+30, %v703
        %v833 = vperm.slane %v791, 2
        %v834 = vperm.slane %v791, 6
        %v837 = vsel %vm828, %v833, 0.0
        %v838 = vsel %vm829, %v834, 0.0
        %v839 = vsel %vm265, %v837, 0.0
        %v840 = vsel %vm265, %v838, 0.0
        %v841 = vadd.f32 %v839, %v840
        %842 = vadd.xlane.f32.xlu0 %v841
        %v843 = vpop.xlane.xlu0 %842
        %v844 = vrot.slane %v843, 4
        %v845 = vadd.f32 %v843, %v844
        %v846 = vrot.slane %v845, 2
        %v847 = vadd.f32 %v845, %v846
        %v848 = vrot.slane %v847, 1
        %v849 = vadd.f32 %v847, %v848
        %s850 = vtos %v849
        %p851 = scmp.lt.f32.partialorder %s850, 0.5
        %p852 = pnand %p804, %p851
        %p853 = pneg %p852
        %v854 = vsel %vm828, 1, 0
        %v855 = vsel %vm829, 1, 0
        %vm856 = vcmp.eq.s32.totalorder %v854, 1
        %vm857 = vcmp.eq.s32.totalorder %v855, 1
        %v858 = vsel %vm856, %v275, 0.0
        %v859 = vsel %vm857, %v276, 0.0
        %v860 = vsel %vm348, %v858, 0.0
        %v861 = vsel %vm348, %v859, 0.0
        %v862 = vadd.f32 %v860, %v861
        %863 = vadd.xlane.f32.xlu0 %v862
        %v864 = vpop.xlane.xlu0 %863
        %v865 = vstv %s746
        %vm866 = vcmp.eq.f32.partialorder %v241, %v865
        %s867 = scalar_select %p853, 1, 0
        %v868 = vstv %s867
        %vm869 = vcmp.eq.s32.totalorder %v868, 1
        %vm870 = vmand %vm866, %vm869
        %v871 = vsel %vm870, %v805, %v743
        %v872 = vsel %vm870, %v864, %v744
        %s873 = scvt.s32.f32 %s867
        %s874 = sadd.f32 %s746, %s873
        %v877 = vunpack.c.l.s4 839922192
        %v878 = vunpack.c.0.s8 %v877
        %v879 = vperm.slane %v864, %v878
        %v881 = vmax.f32 %v224, %v879
        %v882 = vmin.f32 %v228, %v879
        %v884 = vrot.slane %v881, 6
        %v886 = vsub.f32 %v882, %v884
        %v887 = vmax.f32 %v886, 0.0
        %v889 = vrot.slane %v887, 5
        %v890 = vrot.slane %v889, 4
        %v892 = vmul.f32 %v887, %v890
        %v893 = vsub.f32 %v234, %v892
        %v895 = vunpack.c.l.s4 1985246804
        %v896 = vunpack.c.0.s8 %v895
        %v897 = vperm.slane %v864, %v896
        %v898 = vrot.slane %v897, 6
        %v900 = vadd.f32 %v893, %v898
        %v901 = vrcp.pop %v900
        %v902 = vmul.f32 %v900, %v901
        %v903 = vsub.f32 1.0, %v902
        %v904 = vmul.f32 %v901, %v903
        %v905 = vadd.f32 %v901, %v904
        %vm906 = vweird.f32 %v900
        %vm907 = vweird.f32 %v901
        %vm908 = vmor %vm906, %vm907
        %v909 = vsel %vm908, %v901, %v905
        %v910 = vand.u32 2147483647, %v900
        %vm911 = vcmp.eq.f32.partialorder %v910, 8.507059e+37
        %v912 = vand.u32 %v900, 2147483648
        %v913 = vor.u32 1.1754944e-38, %v912
        %v914 = vsel %vm911, %v913, %v909
        %v915 = vmul.f32 %v892, %v914
        %vm916 = vcmp.le.f32.partialorder %v915, 0.45
        %vm917 = vmxor %vm916, 1
        %vm918 = vmand %vm869, %vm917
        %v919 = vsel %vm918, 1.0, %v791
        %v920 = vsel %vm265, %v830, -inf
        %v921 = vsel %vm265, %v831, -inf
        %v922 = vmax.f32 %v920, %v921
        %923 = vmax.xlane.f32.xlu0 %v922
        %v924 = vpop.xlane.xlu0 %923
        %v925 = vrot.slane %v924, 4
        %v926 = vmax.f32 %v924, %v925
        %v927 = vrot.slane %v926, 2
        %v928 = vmax.f32 %v926, %v927
        %v929 = vrot.slane %v928, 1
        %v930 = vmax.f32 %v928, %v929
        %s931 = vtos %v930
        %p932 = scmp.gt.f32.partialorder %s931, -5e+29
        %v933 = vstv %s931
        %vm934 = vcmp.eq.f32.partialorder %v830, %v933
        %vm935 = vcmp.eq.f32.partialorder %v831, %v933
        %v936 = vsel %vm934, %v241, 256.0
        %v937 = vsel %vm935, %v242, 256.0
        %v938 = vsel %vm265, %v936, inf
        %v939 = vsel %vm265, %v937, inf
        %v940 = vmin.f32 %v938, %v939
        %941 = vmin.xlane.f32.xlu0 %v940
        %v942 = vpop.xlane.xlu0 %941
        %v943 = vrot.slane %v942, 4
        %v944 = vmin.f32 %v942, %v943
        %v945 = vrot.slane %v944, 2
        %v946 = vmin.f32 %v944, %v945
        %v947 = vrot.slane %v946, 1
        %v948 = vmin.f32 %v946, %v947
        %s949 = vtos %v948
        %v950 = vstv %s949
        %vm951 = vcmp.eq.f32.partialorder %v241, %v950
        %vm952 = vcmp.eq.f32.partialorder %v242, %v950
        %s953 = scalar_select %p932, 1, 0
        %v954 = vstv %s953
        %vm955 = vcmp.eq.s32.totalorder %v954, 1
        %vm956 = vmand %vm951, %vm955
        %vm957 = vmand %vm952, %vm955
        %v958 = vsel %vm956, -1e+30, %v830
        %v959 = vsel %vm957, -1e+30, %v831
        %v961 = vperm.slane %v919, 2
        %v962 = vperm.slane %v919, 6
        %v965 = vsel %vm956, %v961, 0.0
        %v966 = vsel %vm957, %v962, 0.0
        %v967 = vsel %vm265, %v965, 0.0
        %v968 = vsel %vm265, %v966, 0.0
        %v969 = vadd.f32 %v967, %v968
        %970 = vadd.xlane.f32.xlu0 %v969
        %v971 = vpop.xlane.xlu0 %970
        %v972 = vrot.slane %v971, 4
        %v973 = vadd.f32 %v971, %v972
        %v974 = vrot.slane %v973, 2
        %v975 = vadd.f32 %v973, %v974
        %v976 = vrot.slane %v975, 1
        %v977 = vadd.f32 %v975, %v976
        %s978 = vtos %v977
        %p979 = scmp.lt.f32.partialorder %s978, 0.5
        %p980 = pnand %p932, %p979
        %p981 = pneg %p980
        %v982 = vsel %vm956, 1, 0
        %v983 = vsel %vm957, 1, 0
        %vm984 = vcmp.eq.s32.totalorder %v982, 1
        %vm985 = vcmp.eq.s32.totalorder %v983, 1
        %v986 = vsel %vm984, %v275, 0.0
        %v987 = vsel %vm985, %v276, 0.0
        %v988 = vsel %vm348, %v986, 0.0
        %v989 = vsel %vm348, %v987, 0.0
        %v990 = vadd.f32 %v988, %v989
        %991 = vadd.xlane.f32.xlu0 %v990
        %v992 = vpop.xlane.xlu0 %991
        %v993 = vstv %s874
        %vm994 = vcmp.eq.f32.partialorder %v241, %v993
        %s995 = scalar_select %p981, 1, 0
        %v996 = vstv %s995
        %vm997 = vcmp.eq.s32.totalorder %v996, 1
        %vm998 = vmand %vm994, %vm997
        %v999 = vsel %vm998, %v933, %v871
        %v1000 = vsel %vm998, %v992, %v872
        %s1001 = scvt.s32.f32 %s995
        %s1002 = sadd.f32 %s874, %s1001
        %v1005 = vunpack.c.l.s4 839922192
        %v1006 = vunpack.c.0.s8 %v1005
        %v1007 = vperm.slane %v992, %v1006
        %v1009 = vmax.f32 %v224, %v1007
        %v1010 = vmin.f32 %v228, %v1007
        %v1012 = vrot.slane %v1009, 6
        %v1014 = vsub.f32 %v1010, %v1012
        %v1015 = vmax.f32 %v1014, 0.0
        %v1017 = vrot.slane %v1015, 5
        %v1018 = vrot.slane %v1017, 4
        %v1020 = vmul.f32 %v1015, %v1018
        %v1021 = vsub.f32 %v234, %v1020
        %v1023 = vunpack.c.l.s4 1985246804
        %v1024 = vunpack.c.0.s8 %v1023
        %v1025 = vperm.slane %v992, %v1024
        %v1026 = vrot.slane %v1025, 6
        %v1028 = vadd.f32 %v1021, %v1026
        %v1029 = vrcp.pop %v1028
        %v1030 = vmul.f32 %v1028, %v1029
        %v1031 = vsub.f32 1.0, %v1030
        %v1032 = vmul.f32 %v1029, %v1031
        %v1033 = vadd.f32 %v1029, %v1032
        %vm1034 = vweird.f32 %v1028
        %vm1035 = vweird.f32 %v1029
        %vm1036 = vmor %vm1034, %vm1035
        %v1037 = vsel %vm1036, %v1029, %v1033
        %v1038 = vand.u32 2147483647, %v1028
        %vm1039 = vcmp.eq.f32.partialorder %v1038, 8.507059e+37
        %v1040 = vand.u32 %v1028, 2147483648
        %v1041 = vor.u32 1.1754944e-38, %v1040
        %v1042 = vsel %vm1039, %v1041, %v1037
        %v1043 = vmul.f32 %v1020, %v1042
        %vm1044 = vcmp.le.f32.partialorder %v1043, 0.45
        %vm1045 = vmxor %vm1044, 1
        %vm1046 = vmand %vm997, %vm1045
        %v1047 = vsel %vm1046, 1.0, %v919
        %v1048 = vsel %vm265, %v958, -inf
        %v1049 = vsel %vm265, %v959, -inf
        %v1050 = vmax.f32 %v1048, %v1049
        %1051 = vmax.xlane.f32.xlu0 %v1050
        %v1052 = vpop.xlane.xlu0 %1051
        %v1053 = vrot.slane %v1052, 4
        %v1054 = vmax.f32 %v1052, %v1053
        %v1055 = vrot.slane %v1054, 2
        %v1056 = vmax.f32 %v1054, %v1055
        %v1057 = vrot.slane %v1056, 1
        %v1058 = vmax.f32 %v1056, %v1057
        %s1059 = vtos %v1058
        %p1060 = scmp.gt.f32.partialorder %s1059, -5e+29
        %v1061 = vstv %s1059
        %vm1062 = vcmp.eq.f32.partialorder %v958, %v1061
        %vm1063 = vcmp.eq.f32.partialorder %v959, %v1061
        %v1064 = vsel %vm1062, %v241, 256.0
        %v1065 = vsel %vm1063, %v242, 256.0
        %v1066 = vsel %vm265, %v1064, inf
        %v1067 = vsel %vm265, %v1065, inf
        %v1068 = vmin.f32 %v1066, %v1067
        %1069 = vmin.xlane.f32.xlu0 %v1068
        %v1070 = vpop.xlane.xlu0 %1069
        %v1071 = vrot.slane %v1070, 4
        %v1072 = vmin.f32 %v1070, %v1071
        %v1073 = vrot.slane %v1072, 2
        %v1074 = vmin.f32 %v1072, %v1073
        %v1075 = vrot.slane %v1074, 1
        %v1076 = vmin.f32 %v1074, %v1075
        %s1077 = vtos %v1076
        %v1078 = vstv %s1077
        %vm1079 = vcmp.eq.f32.partialorder %v241, %v1078
        %vm1080 = vcmp.eq.f32.partialorder %v242, %v1078
        %s1081 = scalar_select %p1060, 1, 0
        %v1082 = vstv %s1081
        %vm1083 = vcmp.eq.s32.totalorder %v1082, 1
        %vm1084 = vmand %vm1079, %vm1083
        %vm1085 = vmand %vm1080, %vm1083
        %v1086 = vsel %vm1084, -1e+30, %v958
        %v1087 = vsel %vm1085, -1e+30, %v959
        %v1089 = vperm.slane %v1047, 2
        %v1090 = vperm.slane %v1047, 6
        %v1093 = vsel %vm1084, %v1089, 0.0
        %v1094 = vsel %vm1085, %v1090, 0.0
        %v1095 = vsel %vm265, %v1093, 0.0
        %v1096 = vsel %vm265, %v1094, 0.0
        %v1097 = vadd.f32 %v1095, %v1096
        %1098 = vadd.xlane.f32.xlu0 %v1097
        %v1099 = vpop.xlane.xlu0 %1098
        %v1100 = vrot.slane %v1099, 4
        %v1101 = vadd.f32 %v1099, %v1100
        %v1102 = vrot.slane %v1101, 2
        %v1103 = vadd.f32 %v1101, %v1102
        %v1104 = vrot.slane %v1103, 1
        %v1105 = vadd.f32 %v1103, %v1104
        %s1106 = vtos %v1105
        %p1107 = scmp.lt.f32.partialorder %s1106, 0.5
        %p1108 = pnand %p1060, %p1107
        %p1109 = pneg %p1108
        %v1110 = vsel %vm1084, 1, 0
        %v1111 = vsel %vm1085, 1, 0
        %vm1112 = vcmp.eq.s32.totalorder %v1110, 1
        %vm1113 = vcmp.eq.s32.totalorder %v1111, 1
        %v1114 = vsel %vm1112, %v275, 0.0
        %v1115 = vsel %vm1113, %v276, 0.0
        %v1116 = vsel %vm348, %v1114, 0.0
        %v1117 = vsel %vm348, %v1115, 0.0
        %v1118 = vadd.f32 %v1116, %v1117
        %1119 = vadd.xlane.f32.xlu0 %v1118
        %v1120 = vpop.xlane.xlu0 %1119
        %v1121 = vstv %s1002
        %vm1122 = vcmp.eq.f32.partialorder %v241, %v1121
        %s1123 = scalar_select %p1109, 1, 0
        %v1124 = vstv %s1123
        %vm1125 = vcmp.eq.s32.totalorder %v1124, 1
        %vm1126 = vmand %vm1122, %vm1125
        %v1127 = vsel %vm1126, %v1061, %v999
        %v1128 = vsel %vm1126, %v1120, %v1000
        %s1129 = scvt.s32.f32 %s1123
        %s1130 = sadd.f32 %s1002, %s1129
        %v1133 = vunpack.c.l.s4 839922192
        %v1134 = vunpack.c.0.s8 %v1133
        %v1135 = vperm.slane %v1120, %v1134
        %v1137 = vmax.f32 %v224, %v1135
        %v1138 = vmin.f32 %v228, %v1135
        %v1140 = vrot.slane %v1137, 6
        %v1142 = vsub.f32 %v1138, %v1140
        %v1143 = vmax.f32 %v1142, 0.0
        %v1145 = vrot.slane %v1143, 5
        %v1146 = vrot.slane %v1145, 4
        %v1148 = vmul.f32 %v1143, %v1146
        %v1149 = vsub.f32 %v234, %v1148
        %v1151 = vunpack.c.l.s4 1985246804
        %v1152 = vunpack.c.0.s8 %v1151
        %v1153 = vperm.slane %v1120, %v1152
        %v1154 = vrot.slane %v1153, 6
        %v1156 = vadd.f32 %v1149, %v1154
        %v1157 = vrcp.pop %v1156
        %v1158 = vmul.f32 %v1156, %v1157
        %v1159 = vsub.f32 1.0, %v1158
        %v1160 = vmul.f32 %v1157, %v1159
        %v1161 = vadd.f32 %v1157, %v1160
        %vm1162 = vweird.f32 %v1156
        %vm1163 = vweird.f32 %v1157
        %vm1164 = vmor %vm1162, %vm1163
        %v1165 = vsel %vm1164, %v1157, %v1161
        %v1166 = vand.u32 2147483647, %v1156
        %vm1167 = vcmp.eq.f32.partialorder %v1166, 8.507059e+37
        %v1168 = vand.u32 %v1156, 2147483648
        %v1169 = vor.u32 1.1754944e-38, %v1168
        %v1170 = vsel %vm1167, %v1169, %v1165
        %v1171 = vmul.f32 %v1148, %v1170
        %vm1172 = vcmp.le.f32.partialorder %v1171, 0.45
        %vm1173 = vmxor %vm1172, 1
        %vm1174 = vmand %vm1125, %vm1173
        %v1175 = vsel %vm1174, 1.0, %v1047
        %v1176 = vsel %vm265, %v1086, -inf
        %v1177 = vsel %vm265, %v1087, -inf
        %v1178 = vmax.f32 %v1176, %v1177
        %1179 = vmax.xlane.f32.xlu0 %v1178
        %v1180 = vpop.xlane.xlu0 %1179
        %v1181 = vrot.slane %v1180, 4
        %v1182 = vmax.f32 %v1180, %v1181
        %v1183 = vrot.slane %v1182, 2
        %v1184 = vmax.f32 %v1182, %v1183
        %v1185 = vrot.slane %v1184, 1
        %v1186 = vmax.f32 %v1184, %v1185
        %s1187 = vtos %v1186
        %p1188 = scmp.gt.f32.partialorder %s1187, -5e+29
        %v1189 = vstv %s1187
        %vm1190 = vcmp.eq.f32.partialorder %v1086, %v1189
        %vm1191 = vcmp.eq.f32.partialorder %v1087, %v1189
        %v1192 = vsel %vm1190, %v241, 256.0
        %v1193 = vsel %vm1191, %v242, 256.0
        %v1194 = vsel %vm265, %v1192, inf
        %v1195 = vsel %vm265, %v1193, inf
        %v1196 = vmin.f32 %v1194, %v1195
        %1197 = vmin.xlane.f32.xlu0 %v1196
        %v1198 = vpop.xlane.xlu0 %1197
        %v1199 = vrot.slane %v1198, 4
        %v1200 = vmin.f32 %v1198, %v1199
        %v1201 = vrot.slane %v1200, 2
        %v1202 = vmin.f32 %v1200, %v1201
        %v1203 = vrot.slane %v1202, 1
        %v1204 = vmin.f32 %v1202, %v1203
        %s1205 = vtos %v1204
        %v1206 = vstv %s1205
        %vm1207 = vcmp.eq.f32.partialorder %v241, %v1206
        %vm1208 = vcmp.eq.f32.partialorder %v242, %v1206
        %s1209 = scalar_select %p1188, 1, 0
        %v1210 = vstv %s1209
        %vm1211 = vcmp.eq.s32.totalorder %v1210, 1
        %vm1212 = vmand %vm1207, %vm1211
        %vm1213 = vmand %vm1208, %vm1211
        %v1214 = vsel %vm1212, -1e+30, %v1086
        %v1215 = vsel %vm1213, -1e+30, %v1087
        %v1217 = vperm.slane %v1175, 2
        %v1218 = vperm.slane %v1175, 6
        %v1221 = vsel %vm1212, %v1217, 0.0
        %v1222 = vsel %vm1213, %v1218, 0.0
        %v1223 = vsel %vm265, %v1221, 0.0
        %v1224 = vsel %vm265, %v1222, 0.0
        %v1225 = vadd.f32 %v1223, %v1224
        %1226 = vadd.xlane.f32.xlu0 %v1225
        %v1227 = vpop.xlane.xlu0 %1226
        %v1228 = vrot.slane %v1227, 4
        %v1229 = vadd.f32 %v1227, %v1228
        %v1230 = vrot.slane %v1229, 2
        %v1231 = vadd.f32 %v1229, %v1230
        %v1232 = vrot.slane %v1231, 1
        %v1233 = vadd.f32 %v1231, %v1232
        %s1234 = vtos %v1233
        %p1235 = scmp.lt.f32.partialorder %s1234, 0.5
        %p1236 = pnand %p1188, %p1235
        %p1237 = pneg %p1236
        %v1238 = vsel %vm1212, 1, 0
        %v1239 = vsel %vm1213, 1, 0
        %vm1240 = vcmp.eq.s32.totalorder %v1238, 1
        %vm1241 = vcmp.eq.s32.totalorder %v1239, 1
        %v1242 = vsel %vm1240, %v275, 0.0
        %v1243 = vsel %vm1241, %v276, 0.0
        %v1244 = vsel %vm348, %v1242, 0.0
        %v1245 = vsel %vm348, %v1243, 0.0
        %v1246 = vadd.f32 %v1244, %v1245
        %1247 = vadd.xlane.f32.xlu0 %v1246
        %v1248 = vpop.xlane.xlu0 %1247
        %v1249 = vstv %s1130
        %vm1250 = vcmp.eq.f32.partialorder %v241, %v1249
        %s1251 = scalar_select %p1237, 1, 0
        %v1252 = vstv %s1251
        %vm1253 = vcmp.eq.s32.totalorder %v1252, 1
        %vm1254 = vmand %vm1250, %vm1253
        %v1255 = vsel %vm1254, %v1189, %v1127
        %v1256 = vsel %vm1254, %v1248, %v1128
        %s1257 = scvt.s32.f32 %s1251
        %s1258 = sadd.f32 %s1130, %s1257
        %v1261 = vunpack.c.l.s4 839922192
        %v1262 = vunpack.c.0.s8 %v1261
        %v1263 = vperm.slane %v1248, %v1262
        %v1265 = vmax.f32 %v224, %v1263
        %v1266 = vmin.f32 %v228, %v1263
        %v1268 = vrot.slane %v1265, 6
        %v1270 = vsub.f32 %v1266, %v1268
        %v1271 = vmax.f32 %v1270, 0.0
        %v1273 = vrot.slane %v1271, 5
        %v1274 = vrot.slane %v1273, 4
        %v1276 = vmul.f32 %v1271, %v1274
        %v1277 = vsub.f32 %v234, %v1276
        %v1279 = vunpack.c.l.s4 1985246804
        %v1280 = vunpack.c.0.s8 %v1279
        %v1281 = vperm.slane %v1248, %v1280
        %v1282 = vrot.slane %v1281, 6
        %v1284 = vadd.f32 %v1277, %v1282
        %v1285 = vrcp.pop %v1284
        %v1286 = vmul.f32 %v1284, %v1285
        %v1287 = vsub.f32 1.0, %v1286
        %v1288 = vmul.f32 %v1285, %v1287
        %v1289 = vadd.f32 %v1285, %v1288
        %vm1290 = vweird.f32 %v1284
        %vm1291 = vweird.f32 %v1285
        %vm1292 = vmor %vm1290, %vm1291
        %v1293 = vsel %vm1292, %v1285, %v1289
        %v1294 = vand.u32 2147483647, %v1284
        %vm1295 = vcmp.eq.f32.partialorder %v1294, 8.507059e+37
        %v1296 = vand.u32 %v1284, 2147483648
        %v1297 = vor.u32 1.1754944e-38, %v1296
        %v1298 = vsel %vm1295, %v1297, %v1293
        %v1299 = vmul.f32 %v1276, %v1298
        %vm1300 = vcmp.le.f32.partialorder %v1299, 0.45
        %vm1301 = vmxor %vm1300, 1
        %vm1302 = vmand %vm1253, %vm1301
        %v1303 = vsel %vm1302, 1.0, %v1175
        %v1304 = vsel %vm265, %v1214, -inf
        %v1305 = vsel %vm265, %v1215, -inf
        %v1306 = vmax.f32 %v1304, %v1305
        %1307 = vmax.xlane.f32.xlu0 %v1306
        %v1308 = vpop.xlane.xlu0 %1307
        %v1309 = vrot.slane %v1308, 4
        %v1310 = vmax.f32 %v1308, %v1309
        %v1311 = vrot.slane %v1310, 2
        %v1312 = vmax.f32 %v1310, %v1311
        %v1313 = vrot.slane %v1312, 1
        %v1314 = vmax.f32 %v1312, %v1313
        %s1315 = vtos %v1314
        %p1316 = scmp.gt.f32.partialorder %s1315, -5e+29
        %v1317 = vstv %s1315
        %vm1318 = vcmp.eq.f32.partialorder %v1214, %v1317
        %vm1319 = vcmp.eq.f32.partialorder %v1215, %v1317
        %v1320 = vsel %vm1318, %v241, 256.0
        %v1321 = vsel %vm1319, %v242, 256.0
        %v1322 = vsel %vm265, %v1320, inf
        %v1323 = vsel %vm265, %v1321, inf
        %v1324 = vmin.f32 %v1322, %v1323
        %1325 = vmin.xlane.f32.xlu0 %v1324
        %v1326 = vpop.xlane.xlu0 %1325
        %v1327 = vrot.slane %v1326, 4
        %v1328 = vmin.f32 %v1326, %v1327
        %v1329 = vrot.slane %v1328, 2
        %v1330 = vmin.f32 %v1328, %v1329
        %v1331 = vrot.slane %v1330, 1
        %v1332 = vmin.f32 %v1330, %v1331
        %s1333 = vtos %v1332
        %v1334 = vstv %s1333
        %vm1335 = vcmp.eq.f32.partialorder %v241, %v1334
        %vm1336 = vcmp.eq.f32.partialorder %v242, %v1334
        %s1337 = scalar_select %p1316, 1, 0
        %v1338 = vstv %s1337
        %vm1339 = vcmp.eq.s32.totalorder %v1338, 1
        %vm1340 = vmand %vm1335, %vm1339
        %vm1341 = vmand %vm1336, %vm1339
        %v1342 = vsel %vm1340, -1e+30, %v1214
        %v1343 = vsel %vm1341, -1e+30, %v1215
        %v1345 = vperm.slane %v1303, 2
        %v1346 = vperm.slane %v1303, 6
        %v1349 = vsel %vm1340, %v1345, 0.0
        %v1350 = vsel %vm1341, %v1346, 0.0
        %v1351 = vsel %vm265, %v1349, 0.0
        %v1352 = vsel %vm265, %v1350, 0.0
        %v1353 = vadd.f32 %v1351, %v1352
        %1354 = vadd.xlane.f32.xlu0 %v1353
        %v1355 = vpop.xlane.xlu0 %1354
        %v1356 = vrot.slane %v1355, 4
        %v1357 = vadd.f32 %v1355, %v1356
        %v1358 = vrot.slane %v1357, 2
        %v1359 = vadd.f32 %v1357, %v1358
        %v1360 = vrot.slane %v1359, 1
        %v1361 = vadd.f32 %v1359, %v1360
        %s1362 = vtos %v1361
        %p1363 = scmp.lt.f32.partialorder %s1362, 0.5
        %p1364 = pnand %p1316, %p1363
        %p1365 = pneg %p1364
        %v1366 = vsel %vm1340, 1, 0
        %v1367 = vsel %vm1341, 1, 0
        %vm1368 = vcmp.eq.s32.totalorder %v1366, 1
        %vm1369 = vcmp.eq.s32.totalorder %v1367, 1
        %v1370 = vsel %vm1368, %v275, 0.0
        %v1371 = vsel %vm1369, %v276, 0.0
        %v1372 = vsel %vm348, %v1370, 0.0
        %v1373 = vsel %vm348, %v1371, 0.0
        %v1374 = vadd.f32 %v1372, %v1373
        %1375 = vadd.xlane.f32.xlu0 %v1374
        %v1376 = vpop.xlane.xlu0 %1375
        %v1377 = vstv %s1258
        %vm1378 = vcmp.eq.f32.partialorder %v241, %v1377
        %s1379 = scalar_select %p1365, 1, 0
        %v1380 = vstv %s1379
        %vm1381 = vcmp.eq.s32.totalorder %v1380, 1
        %vm1382 = vmand %vm1378, %vm1381
        %v1383 = vsel %vm1382, %v1317, %v1255
        %v1384 = vsel %vm1382, %v1376, %v1256
        %s1385 = scvt.s32.f32 %s1379
        %s1386 = sadd.f32 %s1258, %s1385
        %v1389 = vunpack.c.l.s4 839922192
        %v1390 = vunpack.c.0.s8 %v1389
        %v1391 = vperm.slane %v1376, %v1390
        %v1393 = vmax.f32 %v224, %v1391
        %v1394 = vmin.f32 %v228, %v1391
        %v1396 = vrot.slane %v1393, 6
        %v1398 = vsub.f32 %v1394, %v1396
        %v1399 = vmax.f32 %v1398, 0.0
        %v1401 = vrot.slane %v1399, 5
        %v1402 = vrot.slane %v1401, 4
        %v1404 = vmul.f32 %v1399, %v1402
        %v1405 = vsub.f32 %v234, %v1404
        %v1407 = vunpack.c.l.s4 1985246804
        %v1408 = vunpack.c.0.s8 %v1407
        %v1409 = vperm.slane %v1376, %v1408
        %v1410 = vrot.slane %v1409, 6
        %v1412 = vadd.f32 %v1405, %v1410
        %v1413 = vrcp.pop %v1412
        %v1414 = vmul.f32 %v1412, %v1413
        %v1415 = vsub.f32 1.0, %v1414
        %v1416 = vmul.f32 %v1413, %v1415
        %v1417 = vadd.f32 %v1413, %v1416
        %vm1418 = vweird.f32 %v1412
        %vm1419 = vweird.f32 %v1413
        %vm1420 = vmor %vm1418, %vm1419
        %v1421 = vsel %vm1420, %v1413, %v1417
        %v1422 = vand.u32 2147483647, %v1412
        %vm1423 = vcmp.eq.f32.partialorder %v1422, 8.507059e+37
        %v1424 = vand.u32 %v1412, 2147483648
        %v1425 = vor.u32 1.1754944e-38, %v1424
        %v1426 = vsel %vm1423, %v1425, %v1421
        %v1427 = vmul.f32 %v1404, %v1426
        %vm1428 = vcmp.le.f32.partialorder %v1427, 0.45
        %vm1429 = vmxor %vm1428, 1
        %vm1430 = vmand %vm1381, %vm1429
        %v1431 = vsel %vm1430, 1.0, %v1303
        %v1432 = vsel %vm265, %v1342, -inf
        %v1433 = vsel %vm265, %v1343, -inf
        %v1434 = vmax.f32 %v1432, %v1433
        %1435 = vmax.xlane.f32.xlu0 %v1434
        %v1436 = vpop.xlane.xlu0 %1435
        %v1437 = vrot.slane %v1436, 4
        %v1438 = vmax.f32 %v1436, %v1437
        %v1439 = vrot.slane %v1438, 2
        %v1440 = vmax.f32 %v1438, %v1439
        %v1441 = vrot.slane %v1440, 1
        %v1442 = vmax.f32 %v1440, %v1441
        %s1443 = vtos %v1442
        %p1444 = scmp.gt.f32.partialorder %s1443, -5e+29
        %v1445 = vstv %s1443
        %vm1446 = vcmp.eq.f32.partialorder %v1342, %v1445
        %vm1447 = vcmp.eq.f32.partialorder %v1343, %v1445
        %v1448 = vsel %vm1446, %v241, 256.0
        %v1449 = vsel %vm1447, %v242, 256.0
        %v1450 = vsel %vm265, %v1448, inf
        %v1451 = vsel %vm265, %v1449, inf
        %v1452 = vmin.f32 %v1450, %v1451
        %1453 = vmin.xlane.f32.xlu0 %v1452
        %v1454 = vpop.xlane.xlu0 %1453
        %v1455 = vrot.slane %v1454, 4
        %v1456 = vmin.f32 %v1454, %v1455
        %v1457 = vrot.slane %v1456, 2
        %v1458 = vmin.f32 %v1456, %v1457
        %v1459 = vrot.slane %v1458, 1
        %v1460 = vmin.f32 %v1458, %v1459
        %s1461 = vtos %v1460
        %v1462 = vstv %s1461
        %vm1463 = vcmp.eq.f32.partialorder %v241, %v1462
        %vm1464 = vcmp.eq.f32.partialorder %v242, %v1462
        %s1465 = scalar_select %p1444, 1, 0
        %v1466 = vstv %s1465
        %vm1467 = vcmp.eq.s32.totalorder %v1466, 1
        %vm1468 = vmand %vm1463, %vm1467
        %vm1469 = vmand %vm1464, %vm1467
        %v1471 = vperm.slane %v1431, 2
        %v1472 = vperm.slane %v1431, 6
        %v1475 = vsel %vm1468, %v1471, 0.0
        %v1476 = vsel %vm1469, %v1472, 0.0
        %v1477 = vsel %vm265, %v1475, 0.0
        %v1478 = vsel %vm265, %v1476, 0.0
        %v1479 = vadd.f32 %v1477, %v1478
        %1480 = vadd.xlane.f32.xlu0 %v1479
        %v1481 = vpop.xlane.xlu0 %1480
        %v1482 = vrot.slane %v1481, 4
        %v1483 = vadd.f32 %v1481, %v1482
        %v1484 = vrot.slane %v1483, 2
        %v1485 = vadd.f32 %v1483, %v1484
        %v1486 = vrot.slane %v1485, 1
        %v1487 = vadd.f32 %v1485, %v1486
        %s1488 = vtos %v1487
        %p1489 = scmp.lt.f32.partialorder %s1488, 0.5
        %p1490 = pnand %p1444, %p1489
        %p1491 = pneg %p1490
        %v1492 = vsel %vm1468, 1, 0
        %v1493 = vsel %vm1469, 1, 0
        %vm1494 = vcmp.eq.s32.totalorder %v1492, 1
        %vm1495 = vcmp.eq.s32.totalorder %v1493, 1
        %v1496 = vsel %vm1494, %v275, 0.0
        %v1497 = vsel %vm1495, %v276, 0.0
        %v1498 = vsel %vm348, %v1496, 0.0
        %v1499 = vsel %vm348, %v1497, 0.0
        %v1500 = vadd.f32 %v1498, %v1499
        %1501 = vadd.xlane.f32.xlu0 %v1500
        %v1502 = vpop.xlane.xlu0 %1501
        %v1503 = vstv %s1386
        %vm1504 = vcmp.eq.f32.partialorder %v241, %v1503
        %s1505 = scalar_select %p1491, 1, 0
        %v1506 = vstv %s1505
        %vm1507 = vcmp.eq.s32.totalorder %v1506, 1
        %vm1508 = vmand %vm1504, %vm1507
        %v1509 = vsel %vm1508, %v1445, %v1383
        %v1510 = vsel %vm1508, %v1502, %v1384
        %v1512 = vrot.slane %v1510, 7
        %v1514 = vsel %vm265, %v1509, %v1512
        %v1515 = vsel %vm268, %v1514, %v1512
        %v1516 = vsel %vm271, %v1515, %v1512
        %v1517 = vsel %vm274, %v1516, %v1512
        %v1518 = vsel %vm348, %v1517, 0.0
        %1519 = vst [vmem:[%s205] sm:$0xff] %v1518
        %p1520 = scmp.lt.s32.totalorder %s17, 1
        %s1521 = scalar_select %p1520, %s17, 1
        %s1522 = smul.addr %s1521, 8
        %s1523 = scalar_lea.vmem %s3, %s1522
        // Predicated region
        $region37: #{detection_output.1} parent=31 // pred_check
          %p1524 = pneg %p108
        $region38: #{detection_output.1} parent=31 // pred_check_branch
          %1526 = sbr.rel (%p1524) target = $region40
        $region39: #{detection_output.1} parent=31 // pred_region
          _
        $region40: #{detection_output.1} parent=31 // pred_fallthru
          _
      $region32: #{detection_output.1} parent=5 // pred_fallthru
        _
      %p1527 = scmp.le.s32.totalorder 2, %s12
      // Predicated region
      $region41: #{detection_output.1} parent=5 // pred_check
        %p1528 = pneg %p1527
      $region42: #{detection_output.1} parent=5 // pred_check_branch
        %1530 = sbr.rel (%p1528) target = $region44
      $region43: #{detection_output.1} parent=5 // pred_region
        %s1531 = ssub.s32 %s12, 2
        // Predicated region
        $region45: #{detection_output.1} parent=43 // pred_check
          %p1532 = pneg %p114
        $region46: #{detection_output.1} parent=43 // pred_check_branch
          %1534 = sbr.rel (%p1532) target = $region48
        $region47: #{detection_output.1} parent=43 // pred_region
          %p1535 = scmp.lt.s32.totalorder %s18, 1
          %s1536 = scalar_select %p1535, %s18, 1
          %s1537 = smul.addr %s1536, 8
          %s1538 = scalar_lea.vmem %s3, %s1537
        $region48: #{detection_output.1} parent=43 // pred_fallthru
          _
      $region44: #{detection_output.1} parent=5 // pred_fallthru
        _
    $region6: #{detection_output.1} parent=1 // loop_footer
      %s16 = sadd.s32 1, %s12
    $region7: #{detection_output.1} parent=1 // loop_footer_branch
      %11 = sbr.rel target = $region3
    $region8: #{detection_output.1} parent=1 // loop_exit
      _
    %1539 = vsyncpa [#allocation3], 1
    %s1540 = scalar_lea.sflag [#allocation3], 1
    %1541 = vsyncpa %s1540, 1

</llo_original>
